<compile_context>
chip_gen: v7x
topology: tpu7x:2x2x1
jax: 0.10.0
libtpu: 0.0.40
codegen_flags: <defaults>
</compile_context>

<pallas_src>
import functools

import jax
import jax.numpy as jnp
from jax.experimental import pallas as pl
from jax.experimental.pallas import tpu as pltpu


# ------------------------------ fused kernel --------------------------------

def _prelu(v, a):
    return jnp.maximum(v, 0.0) + a * jnp.minimum(v, 0.0)


def _fused_kernel(xz_ref, oh_ref, gexp_ref, ent_ref, w1_ref, decw_ref,
                  w_ref, wf_ref, v_ref, bf_ref, o_ref, *, n_layers):
    """Entire mlp_phonon forward in one VMEM-resident kernel.

    xz   : (2N, F)     stacked [x; z]
    oh   : (B, N)      one-hot graph membership
    gexp : (B*51, B)   row-expander one-hot (row b*51+e selects graph b)
    ent  : (B*51, H)   embedding table tiled B times (row b*51+e = energies[e])
    w1   : (F, H)      first node-encoder weight
    decw : (2H, H)     decoder weight (unsplit)
    w    : (3+L, H, H) [w2, w0e, w0g, wl_0 .. wl_{L-1}]
    wf   : (H, 1)      final projection weight
    v    : (8+2L, H)   [b1,a1,b2,dec_b,b0,gamma,beta,a0, bl_0..bl_{L-1}, al_0..al_{L-1}]
    bf   : (1,) SMEM   final projection bias
    out  : (B*51, 1)   DOS, row b*51+e = dos(e, b)
    """
    f32 = jnp.float32
    n_atoms = xz_ref.shape[0] // 2

    b1, a1, b2 = v_ref[0:1, :], v_ref[1:2, :], v_ref[2:3, :]
    dec_b, b0 = v_ref[3:4, :], v_ref[4:5, :]
    gamma, beta, a0 = v_ref[5:6, :], v_ref[6:7, :], v_ref[7:8, :]

    # --- Encoder1.node_encoder on [x; z]: Linear -> PReLU -> Linear ----------
    h = jnp.dot(xz_ref[...], w1_ref[...], preferred_element_type=f32) + b1
    h = _prelu(h, a1)
    xz_enc = jnp.dot(h, w_ref[0], preferred_element_type=f32) + b2          # (2N, H)

    # --- Decoder: scatter_sum(z), scatter_sum(x) fused into one one-hot dot --
    # --- over the lane-concatenated [z_enc | x_enc], then Linear(2H -> H) ----
    zx = jnp.concatenate([xz_enc[n_atoms:, :], xz_enc[:n_atoms, :]], axis=1)  # (N, 2H)
    sums = jnp.dot(oh_ref[...], zx, preferred_element_type=f32)               # (B, 2H) = [z_sum, x_sum]
    graph = jnp.dot(sums, decw_ref[...], preferred_element_type=f32) + dec_b  # (B, H)

    # --- out_layer first Linear(2H, H), split so the (51,B,2H) concat is -----
    # --- never materialized; broadcast over graphs via the one-hot expander --
    g_proj = jnp.dot(graph, w_ref[2], preferred_element_type=f32)             # (B, H)
    hb = (jnp.dot(ent_ref[...], w_ref[1], preferred_element_type=f32)
          + jnp.dot(gexp_ref[...], g_proj, preferred_element_type=f32)
          + b0)                                                                # (B*51, H)

    # --- LayerNorm (biased variance, eps=1e-5) + PReLU, one pass, all rows ---
    mu = jnp.mean(hb, axis=-1, keepdims=True)
    var = jnp.mean((hb - mu) ** 2, axis=-1, keepdims=True)
    hb = (hb - mu) * jax.lax.rsqrt(var + 1e-5) * gamma + beta
    hb = _prelu(hb, a0)

    # --- hidden Linear + PReLU layers (static unroll over L, batched rows) ---
    for i in range(n_layers):
        hb = _prelu(jnp.dot(hb, w_ref[3 + i], preferred_element_type=f32)
                    + v_ref[8 + i:9 + i, :],
                    v_ref[8 + n_layers + i:9 + n_layers + i, :])

    # --- final Linear(H -> 1): one dense store of the whole output block -----
    o_ref[...] = jnp.dot(hb, wf_ref[...], preferred_element_type=f32) + bf_ref[0]


# ------------------------------- JAX wrapper ---------------------------------

def forward_pallas(params, x_in, z_in, pos, batch, n_graphs, r_max):
    # The edge branch (radius_graph / spherical harmonics / edge_encoder) of the
    # original module is dead code: its output is never consumed downstream, so
    # it is omitted here (output is unchanged).
    del pos, r_max

    energies = params["emb"]                                      # (51, H)
    ne, hdim = energies.shape
    w1, b1, a1, w2, b2 = params["node_enc"]
    dec_w, dec_b = params["dec_w"], params["dec_b"]
    w0, b0, gamma, beta, a0, wl, bl, al, wf, bf = params["out_layer"]
    layers = wl.shape[0]

    f32 = jnp.float32
    xz = jnp.concatenate([x_in, z_in], axis=0)                    # (2N, F)
    onehot = (batch[None, :] == jnp.arange(n_graphs)[:, None]).astype(f32)   # (B, N)
    en_tiled = jnp.tile(energies, (n_graphs, 1))                  # (B*51, H)
    g_exp = jnp.repeat(jnp.eye(n_graphs, dtype=f32), ne, axis=0)  # (B*51, B)

    # Packed parameters: one (3+L,H,H) weight stack, one (8+2L,H) vector pack.
    w_stack = jnp.concatenate([jnp.stack([w2, w0[:hdim], w0[hdim:]]), wl], axis=0)
    vecs = jnp.concatenate(
        [jnp.stack([b1[0], a1[0], b2[0], dec_b[0], b0[0], gamma[0], beta[0], a0[0]]),
         bl, al], axis=0)
    bf_s = jnp.reshape(bf, (1,)).astype(f32)                      # scalar bias -> SMEM

    args = (xz, onehot, g_exp, en_tiled, w1, dec_w, w_stack, wf, vecs)

    def _spec(arr):
        nd = arr.ndim
        return pl.BlockSpec(arr.shape, lambda i, _nd=nd: (0,) * _nd)

    out = pl.pallas_call(
        functools.partial(_fused_kernel, n_layers=layers),
        out_shape=jax.ShapeDtypeStruct((n_graphs * ne, 1), jnp.float32),
        grid=(1,),
        in_specs=[_spec(a) for a in args]
                 + [pl.BlockSpec(memory_space=pltpu.MemorySpace.SMEM)],
        out_specs=pl.BlockSpec((n_graphs * ne, 1), lambda i: (0, 0)),
        compiler_params=pltpu.CompilerParams(dimension_semantics=("arbitrary",)),
    )(*args, bf_s)
    return out.reshape(n_graphs, ne)                              # (B, 51)


# --------------------------- params & reference ------------------------------

def init_params(key, layers, n_atom_feats, n_bond_feats, n_hidden):
    hdim = n_hidden
    ks = iter(jax.random.split(key, 8 + layers))

    def lin(k, fin, fout):
        kw, kb = jax.random.split(k)
        s = 1.0 / (fin ** 0.5)
        return (jax.random.uniform(kw, (fin, fout), jnp.float32, -s, s),
                jax.random.uniform(kb, (1, fout), jnp.float32, -s, s))

    emb = 0.1 * jax.random.normal(next(ks), (51, hdim), jnp.float32)
    w1, b1 = lin(next(ks), n_atom_feats, hdim)
    w2, b2 = lin(next(ks), hdim, hdim)
    node_enc = (w1, b1, jnp.full((1, hdim), 0.25, jnp.float32), w2, b2)
    ew1, eb1 = lin(next(ks), n_bond_feats, hdim)                  # dead edge encoder (kept
    ew2, eb2 = lin(next(ks), hdim, hdim)                          # for parameter fidelity)
    edge_enc = (ew1, eb1, jnp.full((1, hdim), 0.25, jnp.float32), ew2, eb2)
    dec_w, dec_b = lin(next(ks), 2 * hdim, hdim)
    w0, b0 = lin(next(ks), 2 * hdim, hdim)
    gamma = jnp.ones((1, hdim), jnp.float32)
    beta = jnp.zeros((1, hdim), jnp.float32)
    a0 = jnp.full((1, hdim), 0.25, jnp.float32)
    wl_l, bl_l = [], []
    for _ in range(layers):
        w, b = lin(next(ks), hdim, hdim)
        wl_l.append(w)
        bl_l.append(b[0])
    wl, bl = jnp.stack(wl_l), jnp.stack(bl_l)
    al = jnp.full((layers, hdim), 0.25, jnp.float32)
    wf, bf = lin(next(ks), hdim, 1)
    return {"emb": emb, "node_enc": node_enc, "edge_enc": edge_enc,
            "dec_w": dec_w, "dec_b": dec_b,
            "out_layer": (w0, b0, gamma, beta, a0, wl, bl, al, wf, bf)}


def ref_forward(params, x_in, z_in, batch, n_graphs):
    def prelu(v, a):
        return jnp.maximum(v, 0.0) + a * jnp.minimum(v, 0.0)

    def enc(v, p):
        w1, b1, a1, w2, b2 = p
        return prelu(v @ w1 + b1, a1) @ w2 + b2

    energies = params["emb"]
    x_e, z_e = enc(x_in, params["node_enc"]), enc(z_in, params["node_enc"])
    onehot = (batch[None, :] == jnp.arange(n_graphs)[:, None]).astype(jnp.float32)
    graph = jnp.concatenate([onehot @ z_e, onehot @ x_e], 1) @ params["dec_w"] + params["dec_b"]
    ne, hdim = energies.shape
    inp = jnp.concatenate([jnp.broadcast_to(energies[:, None, :], (ne, n_graphs, hdim)),
                           jnp.broadcast_to(graph[None, :, :], (ne, n_graphs, hdim))], axis=2)
    w0, b0, gamma, beta, a0, wl, bl, al, wf, bf = params["out_layer"]
    h = inp @ w0 + b0
    mu = h.mean(-1, keepdims=True)
    var = ((h - mu) ** 2).mean(-1, keepdims=True)
    h = prelu((h - mu) / jnp.sqrt(var + 1e-5) * gamma + beta, a0)
    for i in range(wl.shape[0]):
        h = prelu(h @ wl[i] + bl[i], al[i])
    return (h @ wf + bf)[..., 0].T


# ---------------------------------- main -------------------------------------

if __name__ == "__main__":
    layers, n_hidden, n_atom_feats, n_bond_feats = 2, 32, 8, 4
    r_max = 4.0
    n_atoms, n_graphs = 16, 2

    key = jax.random.PRNGKey(0)
    kp, kx, kz, kpos = jax.random.split(key, 4)
    params = init_params(kp, layers, n_atom_feats, n_bond_feats, n_hidden)

    g_x = jax.random.normal(kx, (n_atoms, n_atom_feats), jnp.float32)
    g_z = jax.random.normal(kz, (n_atoms, n_atom_feats), jnp.float32)
    g_pos = 2.0 * jax.random.normal(kpos, (n_atoms, 3), jnp.float32)
    g_batch = jnp.concatenate([jnp.zeros(n_atoms // 2, jnp.int32),
                               jnp.ones(n_atoms // 2, jnp.int32)])

    dos = forward_pallas(params, g_x, g_z, g_pos, g_batch, n_graphs, r_max)
    dos = jax.block_until_ready(dos)

    ref = ref_forward(params, g_x, g_z, g_batch, n_graphs)
    assert dos.shape == (n_graphs, 51), dos.shape
    assert jnp.allclose(dos, ref, atol=1e-3, rtol=1e-3), float(jnp.max(jnp.abs(dos - ref)))
    print("KERNEL_OK")
</pallas_src>

<mosaic_0001>
module attributes {stable_mosaic.version = 11 : i64} {
  func.func @_fused_kernel(%arg0: i32, %arg1: memref<32x8xf32, #tpu.memory_space<vmem>>, %arg2: memref<2x16xf32, #tpu.memory_space<vmem>>, %arg3: memref<102x2xf32, #tpu.memory_space<vmem>>, %arg4: memref<102x32xf32, #tpu.memory_space<vmem>>, %arg5: memref<8x32xf32, #tpu.memory_space<vmem>>, %arg6: memref<64x32xf32, #tpu.memory_space<vmem>>, %arg7: memref<5x32x32xf32, #tpu.memory_space<vmem>>, %arg8: memref<32x1xf32, #tpu.memory_space<vmem>>, %arg9: memref<12x32xf32, #tpu.memory_space<vmem>>, %arg10: memref<1xf32, #tpu.memory_space<smem>>, %arg11: memref<102x1xf32, #tpu.memory_space<vmem>>) attributes {dimension_semantics = [#tpu.dimension_semantics<arbitrary>], iteration_bounds = array<i64: 1>, scalar_prefetch = 0 : i64, scratch_operands = 0 : i64, tpu.core_type = #tpu.core_type<tc>, window_params = [{pipeline_mode = #tpu.pipeline_mode<synchronous>, transform_indices = @transform_0, window_bounds = array<i64: 32, 8>}, {pipeline_mode = #tpu.pipeline_mode<synchronous>, transform_indices = @transform_1, window_bounds = array<i64: 2, 16>}, {pipeline_mode = #tpu.pipeline_mode<synchronous>, transform_indices = @transform_2, window_bounds = array<i64: 102, 2>}, {pipeline_mode = #tpu.pipeline_mode<synchronous>, transform_indices = @transform_3, window_bounds = array<i64: 102, 32>}, {pipeline_mode = #tpu.pipeline_mode<synchronous>, transform_indices = @transform_4, window_bounds = array<i64: 8, 32>}, {pipeline_mode = #tpu.pipeline_mode<synchronous>, transform_indices = @transform_5, window_bounds = array<i64: 64, 32>}, {pipeline_mode = #tpu.pipeline_mode<synchronous>, transform_indices = @transform_6, window_bounds = array<i64: 5, 32, 32>}, {pipeline_mode = #tpu.pipeline_mode<synchronous>, transform_indices = @transform_7, window_bounds = array<i64: 32, 1>}, {pipeline_mode = #tpu.pipeline_mode<synchronous>, transform_indices = @transform_8, window_bounds = array<i64: 12, 32>}, {transform_indices = @transform_9, window_bounds = array<i64: 1>}, {pipeline_mode = #tpu.pipeline_mode<synchronous>, transform_indices = @transform_10, window_bounds = array<i64: 102, 1>}]} {
    %c0 = arith.constant 0 : index
    %c0_0 = arith.constant 0 : index
    %0 = vector.load %arg9[%c0, %c0_0] : memref<12x32xf32, #tpu.memory_space<vmem>>, vector<1x32xf32>
    %c1 = arith.constant 1 : index
    %c0_1 = arith.constant 0 : index
    %1 = vector.load %arg9[%c1, %c0_1] : memref<12x32xf32, #tpu.memory_space<vmem>>, vector<1x32xf32>
    %c2 = arith.constant 2 : index
    %c0_2 = arith.constant 0 : index
    %2 = vector.load %arg9[%c2, %c0_2] : memref<12x32xf32, #tpu.memory_space<vmem>>, vector<1x32xf32>
    %c3 = arith.constant 3 : index
    %c0_3 = arith.constant 0 : index
    %3 = vector.load %arg9[%c3, %c0_3] : memref<12x32xf32, #tpu.memory_space<vmem>>, vector<1x32xf32>
    %c4 = arith.constant 4 : index
    %c0_4 = arith.constant 0 : index
    %4 = vector.load %arg9[%c4, %c0_4] : memref<12x32xf32, #tpu.memory_space<vmem>>, vector<1x32xf32>
    %c5 = arith.constant 5 : index
    %c0_5 = arith.constant 0 : index
    %5 = vector.load %arg9[%c5, %c0_5] : memref<12x32xf32, #tpu.memory_space<vmem>>, vector<1x32xf32>
    %c6 = arith.constant 6 : index
    %c0_6 = arith.constant 0 : index
    %6 = vector.load %arg9[%c6, %c0_6] : memref<12x32xf32, #tpu.memory_space<vmem>>, vector<1x32xf32>
    %c7 = arith.constant 7 : index
    %c0_7 = arith.constant 0 : index
    %7 = vector.load %arg9[%c7, %c0_7] : memref<12x32xf32, #tpu.memory_space<vmem>>, vector<1x32xf32>
    %c0_8 = arith.constant 0 : index
    %c0_9 = arith.constant 0 : index
    %8 = vector.load %arg1[%c0_8, %c0_9] : memref<32x8xf32, #tpu.memory_space<vmem>>, vector<32x8xf32>
    %c0_10 = arith.constant 0 : index
    %c0_11 = arith.constant 0 : index
    %9 = vector.load %arg5[%c0_10, %c0_11] : memref<8x32xf32, #tpu.memory_space<vmem>>, vector<8x32xf32>
    %cst = arith.constant dense<0.000000e+00> : vector<32x32xf32>
    %10 = tpu.matmul %8, %9, %cst {dimension_numbers = #tpu.dot_dimension_numbers<[1], [0], [0], [1], [0, 0, 1, 1], [], []>} : vector<32x8xf32>, vector<8x32xf32>, vector<32x32xf32> -> vector<32x32xf32>
    %11 = vector.broadcast %0 : vector<1x32xf32> to vector<32x32xf32>
    %12 = arith.addf %10, %11 : vector<32x32xf32>
    %cst_12 = arith.constant 0.000000e+00 : f32
    %13 = vector.broadcast %cst_12 : f32 to vector<32x32xf32>
    %14 = arith.maximumf %12, %13 : vector<32x32xf32>
    %cst_13 = arith.constant 0.000000e+00 : f32
    %15 = vector.broadcast %cst_13 : f32 to vector<32x32xf32>
    %16 = arith.minimumf %12, %15 : vector<32x32xf32>
    %17 = vector.broadcast %1 : vector<1x32xf32> to vector<32x32xf32>
    %18 = arith.mulf %17, %16 : vector<32x32xf32>
    %19 = arith.addf %14, %18 : vector<32x32xf32>
    %c0_14 = arith.constant 0 : index
    %c0_15 = arith.constant 0 : index
    %c0_16 = arith.constant 0 : index
    %20 = vector.load %arg7[%c0_14, %c0_15, %c0_16] : memref<5x32x32xf32, #tpu.memory_space<vmem>>, vector<1x32x32xf32>
    %21 = vector.shape_cast %20 : vector<1x32x32xf32> to vector<32x32xf32>
    %cst_17 = arith.constant dense<0.000000e+00> : vector<32x32xf32>
    %22 = tpu.matmul %19, %21, %cst_17 {dimension_numbers = #tpu.dot_dimension_numbers<[1], [0], [0], [1], [0, 0, 1, 1], [], []>} : vector<32x32xf32>, vector<32x32xf32>, vector<32x32xf32> -> vector<32x32xf32>
    %23 = vector.broadcast %2 : vector<1x32xf32> to vector<32x32xf32>
    %24 = arith.addf %22, %23 : vector<32x32xf32>
    %25 = vector.extract_strided_slice %24 {offsets = [16, 0], sizes = [16, 32], strides = [1, 1]} : vector<32x32xf32> to vector<16x32xf32>
    %26 = vector.extract_strided_slice %24 {offsets = [0, 0], sizes = [16, 32], strides = [1, 1]} : vector<32x32xf32> to vector<16x32xf32>
    %27 = tpu.concatenate %25, %26 in 1 : vector<16x32xf32>, vector<16x32xf32> -> vector<16x64xf32>
    %c0_18 = arith.constant 0 : index
    %c0_19 = arith.constant 0 : index
    %28 = vector.load %arg2[%c0_18, %c0_19] : memref<2x16xf32, #tpu.memory_space<vmem>>, vector<2x16xf32>
    %cst_20 = arith.constant dense<0.000000e+00> : vector<2x64xf32>
    %29 = tpu.matmul %28, %27, %cst_20 {dimension_numbers = #tpu.dot_dimension_numbers<[1], [0], [0], [1], [0, 0, 1, 1], [], []>} : vector<2x16xf32>, vector<16x64xf32>, vector<2x64xf32> -> vector<2x64xf32>
    %c0_21 = arith.constant 0 : index
    %c0_22 = arith.constant 0 : index
    %30 = vector.load %arg6[%c0_21, %c0_22] : memref<64x32xf32, #tpu.memory_space<vmem>>, vector<64x32xf32>
    %cst_23 = arith.constant dense<0.000000e+00> : vector<2x32xf32>
    %31 = tpu.matmul %29, %30, %cst_23 {dimension_numbers = #tpu.dot_dimension_numbers<[1], [0], [0], [1], [0, 0, 1, 1], [], []>} : vector<2x64xf32>, vector<64x32xf32>, vector<2x32xf32> -> vector<2x32xf32>
    %32 = vector.broadcast %3 : vector<1x32xf32> to vector<2x32xf32>
    %33 = arith.addf %31, %32 : vector<2x32xf32>
    %c2_24 = arith.constant 2 : index
    %c0_25 = arith.constant 0 : index
    %c0_26 = arith.constant 0 : index
    %34 = vector.load %arg7[%c2_24, %c0_25, %c0_26] : memref<5x32x32xf32, #tpu.memory_space<vmem>>, vector<1x32x32xf32>
    %35 = vector.shape_cast %34 : vector<1x32x32xf32> to vector<32x32xf32>
    %cst_27 = arith.constant dense<0.000000e+00> : vector<2x32xf32>
    %36 = tpu.matmul %33, %35, %cst_27 {dimension_numbers = #tpu.dot_dimension_numbers<[1], [0], [0], [1], [0, 0, 1, 1], [], []>} : vector<2x32xf32>, vector<32x32xf32>, vector<2x32xf32> -> vector<2x32xf32>
    %c0_28 = arith.constant 0 : index
    %c0_29 = arith.constant 0 : index
    %37 = vector.load %arg4[%c0_28, %c0_29] : memref<102x32xf32, #tpu.memory_space<vmem>>, vector<102x32xf32>
    %c1_30 = arith.constant 1 : index
    %c0_31 = arith.constant 0 : index
    %c0_32 = arith.constant 0 : index
    %38 = vector.load %arg7[%c1_30, %c0_31, %c0_32] : memref<5x32x32xf32, #tpu.memory_space<vmem>>, vector<1x32x32xf32>
    %39 = vector.shape_cast %38 : vector<1x32x32xf32> to vector<32x32xf32>
    %cst_33 = arith.constant dense<0.000000e+00> : vector<102x32xf32>
    %40 = tpu.matmul %37, %39, %cst_33 {dimension_numbers = #tpu.dot_dimension_numbers<[1], [0], [0], [1], [0, 0, 1, 1], [], []>} : vector<102x32xf32>, vector<32x32xf32>, vector<102x32xf32> -> vector<102x32xf32>
    %c0_34 = arith.constant 0 : index
    %c0_35 = arith.constant 0 : index
    %41 = vector.load %arg3[%c0_34, %c0_35] : memref<102x2xf32, #tpu.memory_space<vmem>>, vector<102x2xf32>
    %cst_36 = arith.constant dense<0.000000e+00> : vector<102x32xf32>
    %42 = tpu.matmul %41, %36, %cst_36 {dimension_numbers = #tpu.dot_dimension_numbers<[1], [0], [0], [1], [0, 0, 1, 1], [], []>} : vector<102x2xf32>, vector<2x32xf32>, vector<102x32xf32> -> vector<102x32xf32>
    %43 = arith.addf %40, %42 : vector<102x32xf32>
    %44 = vector.broadcast %4 : vector<1x32xf32> to vector<102x32xf32>
    %45 = arith.addf %43, %44 : vector<102x32xf32>
    %cst_37 = arith.constant dense<0.000000e+00> : vector<102xf32>
    %46 = vector.multi_reduction <add>, %45, %cst_37 [1] : vector<102x32xf32> to vector<102xf32>
    %47 = vector.shape_cast %46 : vector<102xf32> to vector<102x1xf32>
    %cst_38 = arith.constant 3.200000e+01 : f32
    %48 = vector.broadcast %cst_38 : f32 to vector<102x1xf32>
    %49 = arith.divf %47, %48 : vector<102x1xf32>
    %50 = vector.broadcast %49 : vector<102x1xf32> to vector<102x32xf32>
    %51 = arith.subf %45, %50 : vector<102x32xf32>
    %52 = arith.mulf %51, %51 : vector<102x32xf32>
    %cst_39 = arith.constant dense<0.000000e+00> : vector<102xf32>
    %53 = vector.multi_reduction <add>, %52, %cst_39 [1] : vector<102x32xf32> to vector<102xf32>
    %54 = vector.shape_cast %53 : vector<102xf32> to vector<102x1xf32>
    %cst_40 = arith.constant 3.200000e+01 : f32
    %55 = vector.broadcast %cst_40 : f32 to vector<102x1xf32>
    %56 = arith.divf %54, %55 : vector<102x1xf32>
    %57 = vector.broadcast %49 : vector<102x1xf32> to vector<102x32xf32>
    %58 = arith.subf %45, %57 : vector<102x32xf32>
    %cst_41 = arith.constant 9.99999974E-6 : f32
    %59 = vector.broadcast %cst_41 : f32 to vector<102x1xf32>
    %60 = arith.addf %56, %59 : vector<102x1xf32>
    %61 = math.rsqrt %60 : vector<102x1xf32>
    %62 = vector.broadcast %61 : vector<102x1xf32> to vector<102x32xf32>
    %63 = arith.mulf %58, %62 : vector<102x32xf32>
    %64 = vector.broadcast %5 : vector<1x32xf32> to vector<102x32xf32>
    %65 = arith.mulf %63, %64 : vector<102x32xf32>
    %66 = vector.broadcast %6 : vector<1x32xf32> to vector<102x32xf32>
    %67 = arith.addf %65, %66 : vector<102x32xf32>
    %cst_42 = arith.constant 0.000000e+00 : f32
    %68 = vector.broadcast %cst_42 : f32 to vector<102x32xf32>
    %69 = arith.maximumf %67, %68 : vector<102x32xf32>
    %cst_43 = arith.constant 0.000000e+00 : f32
    %70 = vector.broadcast %cst_43 : f32 to vector<102x32xf32>
    %71 = arith.minimumf %67, %70 : vector<102x32xf32>
    %72 = vector.broadcast %7 : vector<1x32xf32> to vector<102x32xf32>
    %73 = arith.mulf %72, %71 : vector<102x32xf32>
    %74 = arith.addf %69, %73 : vector<102x32xf32>
    %c3_44 = arith.constant 3 : index
    %c0_45 = arith.constant 0 : index
    %c0_46 = arith.constant 0 : index
    %75 = vector.load %arg7[%c3_44, %c0_45, %c0_46] : memref<5x32x32xf32, #tpu.memory_space<vmem>>, vector<1x32x32xf32>
    %76 = vector.shape_cast %75 : vector<1x32x32xf32> to vector<32x32xf32>
    %cst_47 = arith.constant dense<0.000000e+00> : vector<102x32xf32>
    %77 = tpu.matmul %74, %76, %cst_47 {dimension_numbers = #tpu.dot_dimension_numbers<[1], [0], [0], [1], [0, 0, 1, 1], [], []>} : vector<102x32xf32>, vector<32x32xf32>, vector<102x32xf32> -> vector<102x32xf32>
    %c8 = arith.constant 8 : index
    %c0_48 = arith.constant 0 : index
    %78 = vector.load %arg9[%c8, %c0_48] : memref<12x32xf32, #tpu.memory_space<vmem>>, vector<1x32xf32>
    %79 = vector.broadcast %78 : vector<1x32xf32> to vector<102x32xf32>
    %80 = arith.addf %77, %79 : vector<102x32xf32>
    %c10 = arith.constant 10 : index
    %c0_49 = arith.constant 0 : index
    %81 = vector.load %arg9[%c10, %c0_49] : memref<12x32xf32, #tpu.memory_space<vmem>>, vector<1x32xf32>
    %cst_50 = arith.constant 0.000000e+00 : f32
    %82 = vector.broadcast %cst_50 : f32 to vector<102x32xf32>
    %83 = arith.maximumf %80, %82 : vector<102x32xf32>
    %cst_51 = arith.constant 0.000000e+00 : f32
    %84 = vector.broadcast %cst_51 : f32 to vector<102x32xf32>
    %85 = arith.minimumf %80, %84 : vector<102x32xf32>
    %86 = vector.broadcast %81 : vector<1x32xf32> to vector<102x32xf32>
    %87 = arith.mulf %86, %85 : vector<102x32xf32>
    %88 = arith.addf %83, %87 : vector<102x32xf32>
    %c4_52 = arith.constant 4 : index
    %c0_53 = arith.constant 0 : index
    %c0_54 = arith.constant 0 : index
    %89 = vector.load %arg7[%c4_52, %c0_53, %c0_54] : memref<5x32x32xf32, #tpu.memory_space<vmem>>, vector<1x32x32xf32>
    %90 = vector.shape_cast %89 : vector<1x32x32xf32> to vector<32x32xf32>
    %cst_55 = arith.constant dense<0.000000e+00> : vector<102x32xf32>
    %91 = tpu.matmul %88, %90, %cst_55 {dimension_numbers = #tpu.dot_dimension_numbers<[1], [0], [0], [1], [0, 0, 1, 1], [], []>} : vector<102x32xf32>, vector<32x32xf32>, vector<102x32xf32> -> vector<102x32xf32>
    %c9 = arith.constant 9 : index
    %c0_56 = arith.constant 0 : index
    %92 = vector.load %arg9[%c9, %c0_56] : memref<12x32xf32, #tpu.memory_space<vmem>>, vector<1x32xf32>
    %93 = vector.broadcast %92 : vector<1x32xf32> to vector<102x32xf32>
    %94 = arith.addf %91, %93 : vector<102x32xf32>
    %c11 = arith.constant 11 : index
    %c0_57 = arith.constant 0 : index
    %95 = vector.load %arg9[%c11, %c0_57] : memref<12x32xf32, #tpu.memory_space<vmem>>, vector<1x32xf32>
    %cst_58 = arith.constant 0.000000e+00 : f32
    %96 = vector.broadcast %cst_58 : f32 to vector<102x32xf32>
    %97 = arith.maximumf %94, %96 : vector<102x32xf32>
    %cst_59 = arith.constant 0.000000e+00 : f32
    %98 = vector.broadcast %cst_59 : f32 to vector<102x32xf32>
    %99 = arith.minimumf %94, %98 : vector<102x32xf32>
    %100 = vector.broadcast %95 : vector<1x32xf32> to vector<102x32xf32>
    %101 = arith.mulf %100, %99 : vector<102x32xf32>
    %102 = arith.addf %97, %101 : vector<102x32xf32>
    %c0_60 = arith.constant 0 : index
    %c0_61 = arith.constant 0 : index
    %103 = vector.load %arg8[%c0_60, %c0_61] : memref<32x1xf32, #tpu.memory_space<vmem>>, vector<32x1xf32>
    %cst_62 = arith.constant dense<0.000000e+00> : vector<102x1xf32>
    %104 = tpu.matmul %102, %103, %cst_62 {dimension_numbers = #tpu.dot_dimension_numbers<[1], [0], [0], [1], [0, 0, 1, 1], [], []>} : vector<102x32xf32>, vector<32x1xf32>, vector<102x1xf32> -> vector<102x1xf32>
    %c0_63 = arith.constant 0 : index
    %105 = memref.load %arg10[%c0_63] : memref<1xf32, #tpu.memory_space<smem>>
    %106 = vector.broadcast %105 : f32 to vector<102x1xf32>
    %107 = arith.addf %104, %106 : vector<102x1xf32>
    %c0_64 = arith.constant 0 : index
    %c0_65 = arith.constant 0 : index
    %108 = vector.load %arg11[%c0_64, %c0_65] : memref<102x1xf32, #tpu.memory_space<vmem>>, vector<102x1xf32>
    tpu.vector_store %arg11[%c0_64, %c0_65], %107 {strides = array<i32>} : memref<102x1xf32, #tpu.memory_space<vmem>>, vector<102x1xf32>,
    return
  }
  func.func @transform_0(%arg0: i32) -> (i32, i32) {
    %c0_i32 = arith.constant 0 : i32
    %c0_i32_0 = arith.constant 0 : i32
    %c0_i32_1 = arith.constant 0 : i32
    return %c0_i32, %c0_i32_0 : i32, i32
  }
  func.func @transform_1(%arg0: i32) -> (i32, i32) {
    %c0_i32 = arith.constant 0 : i32
    %c0_i32_0 = arith.constant 0 : i32
    %c0_i32_1 = arith.constant 0 : i32
    return %c0_i32, %c0_i32_0 : i32, i32
  }
  func.func @transform_2(%arg0: i32) -> (i32, i32) {
    %c0_i32 = arith.constant 0 : i32
    %c0_i32_0 = arith.constant 0 : i32
    %c0_i32_1 = arith.constant 0 : i32
    return %c0_i32, %c0_i32_0 : i32, i32
  }
  func.func @transform_3(%arg0: i32) -> (i32, i32) {
    %c0_i32 = arith.constant 0 : i32
    %c0_i32_0 = arith.constant 0 : i32
    %c0_i32_1 = arith.constant 0 : i32
    return %c0_i32, %c0_i32_0 : i32, i32
  }
  func.func @transform_4(%arg0: i32) -> (i32, i32) {
    %c0_i32 = arith.constant 0 : i32
    %c0_i32_0 = arith.constant 0 : i32
    %c0_i32_1 = arith.constant 0 : i32
    return %c0_i32, %c0_i32_0 : i32, i32
  }
  func.func @transform_5(%arg0: i32) -> (i32, i32) {
    %c0_i32 = arith.constant 0 : i32
    %c0_i32_0 = arith.constant 0 : i32
    %c0_i32_1 = arith.constant 0 : i32
    return %c0_i32, %c0_i32_0 : i32, i32
  }
  func.func @transform_6(%arg0: i32) -> (i32, i32, i32) {
    %c0_i32 = arith.constant 0 : i32
    %c0_i32_0 = arith.constant 0 : i32
    %c0_i32_1 = arith.constant 0 : i32
    %c0_i32_2 = arith.constant 0 : i32
    return %c0_i32, %c0_i32_0, %c0_i32_1 : i32, i32, i32
  }
  func.func @transform_7(%arg0: i32) -> (i32, i32) {
    %c0_i32 = arith.constant 0 : i32
    %c0_i32_0 = arith.constant 0 : i32
    %c0_i32_1 = arith.constant 0 : i32
    return %c0_i32, %c0_i32_0 : i32, i32
  }
  func.func @transform_8(%arg0: i32) -> (i32, i32) {
    %c0_i32 = arith.constant 0 : i32
    %c0_i32_0 = arith.constant 0 : i32
    %c0_i32_1 = arith.constant 0 : i32
    return %c0_i32, %c0_i32_0 : i32, i32
  }
  func.func @transform_9(%arg0: i32) -> i32 {
    %c0_i32 = arith.constant 0 : i32
    %c0_i32_0 = arith.constant 0 : i32
    return %c0_i32 : i32
  }
  func.func @transform_10(%arg0: i32) -> (i32, i32) {
    %c0_i32 = arith.constant 0 : i32
    %c0_i32_0 = arith.constant 0 : i32
    %c0_i32_1 = arith.constant 0 : i32
    return %c0_i32, %c0_i32_0 : i32, i32
  }
}

</mosaic_0001>

<llo_original>
// kernel: tpu_custom_call.1
$region0: #{tpu_custom_call.1}
  #allocation0 [shape = 'u32[]', space=smem, size = 0x4, offset = 0x4, fixed_abs, tag = 'smem constant byte address 0x4 - core index']
  #allocation1 [shape = 'u32[144,128]{1,0:T(1,128)}', space=vmem, size = 0x12000, scoped, tag = 'internal scratch']
  #allocation2 [shape = 'f32[1]{0:T(128)S(6)}', space=smem, size = 0x200, scoped, tag = 'scoped memory for tpu_custom_call.1']
  %s0 = inlined_call_operand.vmem [shape: f32[32,8], index: 0, kind: input, shape index: {}]
  %s1 = inlined_call_operand.vmem [shape: f32[2,16], index: 1, kind: input, shape index: {}]
  %s2 = inlined_call_operand.vmem [shape: f32[102,2], index: 2, kind: input, shape index: {}]
  %s3 = inlined_call_operand.vmem [shape: f32[102,32], index: 3, kind: input, shape index: {}]
  %s4 = inlined_call_operand.vmem [shape: f32[8,32], index: 4, kind: input, shape index: {}]
  %s5 = inlined_call_operand.vmem [shape: f32[64,32], index: 5, kind: input, shape index: {}]
  %s6 = inlined_call_operand.vmem [shape: f32[5,32,32], index: 6, kind: input, shape index: {}]
  %s7 = inlined_call_operand.vmem [shape: f32[32,1], index: 7, kind: input, shape index: {}]
  %s8 = inlined_call_operand.vmem [shape: f32[12,32], index: 8, kind: input, shape index: {}]
  %s9 = inlined_call_operand.<no memory space> [shape: f32[1], index: 9, kind: input, shape index: {}]
  %s10 = inlined_call_operand.vmem [shape: f32[102,1], index: 10, kind: output, shape index: {}]
  %s11 = sld [smem:[#allocation0]]
  $region50: #{tpu_custom_call.1} parent=0
    _
  %s13 = ssub.s32 1, %s11
  %s14 = scalar_select 0, %s13, %s11
  %15 = sst [smem:[#allocation2]] %s9
  // Predicated region
  $region2: #{tpu_custom_call.1} parent=0 // pred_check
    _
  $region3: #{tpu_custom_call.1} parent=0 // pred_check_branch
    %17 = sbr.rel (0) target = $region5
  $region4: #{tpu_custom_call.1} parent=0 // pred_region
    _
  $region5: #{tpu_custom_call.1} parent=0 // pred_fallthru
    _
  // Predicated region
  $region6: #{tpu_custom_call.1} parent=0 // pred_check
    _
  $region7: #{tpu_custom_call.1} parent=0 // pred_check_branch
    %19 = sbr.rel (0) target = $region9
  $region8: #{tpu_custom_call.1} parent=0 // pred_region
    _
  $region9: #{tpu_custom_call.1} parent=0 // pred_fallthru
    _
  // Predicated region
  $region10: #{tpu_custom_call.1} parent=0 // pred_check
    _
  $region11: #{tpu_custom_call.1} parent=0 // pred_check_branch
    %21 = sbr.rel (0) target = $region13
  $region12: #{tpu_custom_call.1} parent=0 // pred_region
    _
  $region13: #{tpu_custom_call.1} parent=0 // pred_fallthru
    _
  // Predicated region
  $region14: #{tpu_custom_call.1} parent=0 // pred_check
    _
  $region15: #{tpu_custom_call.1} parent=0 // pred_check_branch
    %23 = sbr.rel (0) target = $region17
  $region16: #{tpu_custom_call.1} parent=0 // pred_region
    _
  $region17: #{tpu_custom_call.1} parent=0 // pred_fallthru
    _
  // Predicated region
  $region18: #{tpu_custom_call.1} parent=0 // pred_check
    _
  $region19: #{tpu_custom_call.1} parent=0 // pred_check_branch
    %25 = sbr.rel (0) target = $region21
  $region20: #{tpu_custom_call.1} parent=0 // pred_region
    _
  $region21: #{tpu_custom_call.1} parent=0 // pred_fallthru
    _
  // Predicated region
  $region22: #{tpu_custom_call.1} parent=0 // pred_check
    _
  $region23: #{tpu_custom_call.1} parent=0 // pred_check_branch
    %27 = sbr.rel (0) target = $region25
  $region24: #{tpu_custom_call.1} parent=0 // pred_region
    _
  $region25: #{tpu_custom_call.1} parent=0 // pred_fallthru
    _
  // Predicated region
  $region26: #{tpu_custom_call.1} parent=0 // pred_check
    _
  $region27: #{tpu_custom_call.1} parent=0 // pred_check_branch
    %29 = sbr.rel (0) target = $region29
  $region28: #{tpu_custom_call.1} parent=0 // pred_region
    _
  $region29: #{tpu_custom_call.1} parent=0 // pred_fallthru
    _
  // Predicated region
  $region30: #{tpu_custom_call.1} parent=0 // pred_check
    _
  $region31: #{tpu_custom_call.1} parent=0 // pred_check_branch
    %31 = sbr.rel (0) target = $region33
  $region32: #{tpu_custom_call.1} parent=0 // pred_region
    _
  $region33: #{tpu_custom_call.1} parent=0 // pred_fallthru
    _
  // Predicated region
  $region34: #{tpu_custom_call.1} parent=0 // pred_check
    _
  $region35: #{tpu_custom_call.1} parent=0 // pred_check_branch
    %33 = sbr.rel (0) target = $region37
  $region36: #{tpu_custom_call.1} parent=0 // pred_region
    _
  $region37: #{tpu_custom_call.1} parent=0 // pred_fallthru
    _
  // Predicated region
  $region38: #{tpu_custom_call.1} parent=0 // pred_check
    _
  $region39: #{tpu_custom_call.1} parent=0 // pred_check_branch
    %35 = sbr.rel (0) target = $region41
  $region40: #{tpu_custom_call.1} parent=0 // pred_region
    _
  $region41: #{tpu_custom_call.1} parent=0 // pred_fallthru
    _
  %v36 = vld [vmem:[%s8] sm:$0x1]
  %v37 = vld [vmem:[%s8 + $0x1] sm:$0x1]
  %v38 = vld [vmem:[%s8 + $0x2] sm:$0x1]
  %v39 = vld [vmem:[%s8 + $0x3] sm:$0x1]
  %v40 = vld [vmem:[%s8 + $0x4] sm:$0x1]
  %v41 = vld [vmem:[%s8 + $0x5] sm:$0x1]
  %v42 = vld [vmem:[%s8 + $0x6] sm:$0x1]
  %v43 = vld [vmem:[%s8 + $0x7] sm:$0x1]
  %v44 = vld [vmem:[%s0] sm:$0xff]
  %v45 = vld [vmem:[%s0 + $0x8] sm:$0xff]
  %v46 = vld [vmem:[%s0 + $0x10] sm:$0xff]
  %v47 = vld [vmem:[%s0 + $0x18] sm:$0xff]
  %v48 = vld [vmem:[%s4] sm:$0xff]
  %v49 = vlaneseq
  %v50 = vshrl.u32 %v49, 7
  %v51 = vsub.s32 0, %v50
  %v52 = vrot.slane %v36, %v51
  %vm53 = vcmask 64512
  %v55 = vsel %vm53, %v44, 0
  %v58 = vsel %vm53, %v45, 0
  %v61 = vsel %vm53, %v46, 0
  %v64 = vsel %vm53, %v47, 0
  %66 = vmatprep.subr.mxu0 0.0
  %67 = vmatpush1.msra.mxu0 %v48
  %68 = vmatprep.subr.mxu0 0.0
  %69 = vmatpush1.msra.mxu0 0.0
  %70 = vmatprep.subr.mxu0 0.0
  %71 = vmatpush1.msra.mxu0 0.0
  %72 = vmatprep.subr.mxu0 0.0
  %73 = vmatpush1.msra.mxu0 0.0
  %74 = vmatprep.subr.mxu0 0.0
  %75 = vmatpush1.msra.mxu0 0.0
  %76 = vmatprep.subr.mxu0 0.0
  %77 = vmatpush1.msra.mxu0 0.0
  %78 = vmatprep.subr.mxu0 0.0
  %79 = vmatpush1.msra.mxu0 0.0
  %80 = vmatprep.subr.mxu0 0.0
  %81 = vmatpush1.msra.mxu0 0.0
  %82 = vmatprep.subr.mxu0 0.0
  %83 = vmatpush1.msra.mxu0 0.0
  %84 = vmatprep.subr.mxu0 0.0
  %85 = vmatpush1.msra.mxu0 0.0
  %86 = vmatprep.subr.mxu0 0.0
  %87 = vmatpush1.msra.mxu0 0.0
  %88 = vmatprep.subr.mxu0 0.0
  %89 = vmatpush1.msra.mxu0 0.0
  %90 = vmatprep.subr.mxu0 0.0
  %91 = vmatpush1.msra.mxu0 0.0
  %92 = vmatprep.subr.mxu0 0.0
  %93 = vmatpush1.msra.mxu0 0.0
  %94 = vmatprep.subr.mxu0 0.0
  %95 = vmatpush1.msra.mxu0 0.0
  %96 = vmatprep.subr.mxu0 0.0
  %97 = vmatpush1.msra.mxu0 0.0
  %98 = vmatprep.subr.mxu0 0.0
  %99 = vmatpush1.msra.mxu0 0.0
  %100 = vmatprep.subr.mxu0 0.0
  %101 = vmatpush1.msra.mxu0 0.0
  %102 = vmatprep.subr.mxu0 0.0
  %103 = vmatpush1.msra.mxu0 0.0
  %104 = vmatprep.subr.mxu0 0.0
  %105 = vmatpush1.msra.mxu0 0.0
  %106 = vmatprep.subr.mxu0 0.0
  %107 = vmatpush1.msra.mxu0 0.0
  %108 = vmatprep.subr.mxu0 0.0
  %109 = vmatpush1.msra.mxu0 0.0
  %110 = vmatprep.subr.mxu0 0.0
  %111 = vmatpush1.msra.mxu0 0.0
  %112 = vmatprep.subr.mxu0 0.0
  %113 = vmatpush1.msra.mxu0 0.0
  %114 = vmatprep.subr.mxu0 0.0
  %115 = vmatpush1.msra.mxu0 0.0
  %116 = vmatprep.subr.mxu0 0.0
  %117 = vmatpush1.msra.mxu0 0.0
  %118 = vmatprep.subr.mxu0 0.0
  %119 = vmatpush1.msra.mxu0 0.0
  %120 = vmatprep.subr.mxu0 0.0
  %121 = vmatpush1.msra.mxu0 0.0
  %122 = vmatprep.subr.mxu0 0.0
  %123 = vmatpush1.msra.mxu0 0.0
  %124 = vmatprep.subr.mxu0 0.0
  %125 = vmatpush1.msra.mxu0 0.0
  %126 = vmatprep.subr.mxu0 0.0
  %127 = vmatpush1.msra.mxu0 0.0
  %128 = vmatprep.subr.mxu0 0.0
  %129 = vmatpush1.msra.mxu0 0.0
  %130 = vmatprep.mubr.f32.mxu0 0.0
  %131 = vmatmul.mubr.f32.gmra.mrb[0].mxu0 %v55
  %v132 = vpop.f32.mrb[0].mxu0
  %v133 = vadd.f32 %v52, %v132
  %v134 = vpop.f32.mrb[0].mxu0
  %135 = vmatprep.mubr.f32.mxu0 0.0
  %136 = vmatmul.mubr.f32.gmra.mrb[0].mxu0 %v58
  %v137 = vpop.f32.mrb[0].mxu0
  %v138 = vadd.f32 %v52, %v137
  %v139 = vpop.f32.mrb[0].mxu0
  %140 = vmatprep.mubr.f32.mxu0 0.0
  %141 = vmatmul.mubr.f32.gmra.mrb[0].mxu0 %v61
  %v142 = vpop.f32.mrb[0].mxu0
  %v143 = vadd.f32 %v52, %v142
  %v144 = vpop.f32.mrb[0].mxu0
  %145 = vmatprep.mubr.f32.mxu0 0.0
  %146 = vmatmul.mubr.f32.gmra.mrb[0].mxu0 %v64
  %v147 = vpop.f32.mrb[0].mxu0
  %v148 = vadd.f32 %v52, %v147
  %v149 = vpop.f32.mrb[0].mxu0
  %150 = vdwg.mxu0
  %v151 = vmax.f32 %v133, 0.0
  %v152 = vmax.f32 %v138, 0.0
  %v153 = vmax.f32 %v143, 0.0
  %v154 = vmax.f32 %v148, 0.0
  %v155 = vmin.f32 %v133, 0.0
  %v156 = vmin.f32 %v138, 0.0
  %v157 = vmin.f32 %v143, 0.0
  %v158 = vmin.f32 %v148, 0.0
  %v159 = vlaneseq
  %v160 = vshrl.u32 %v159, 7
  %v161 = vsub.s32 0, %v160
  %v162 = vrot.slane %v37, %v161
  %v163 = vmul.f32 %v162, %v155
  %v164 = vmul.f32 %v162, %v156
  %v165 = vmul.f32 %v162, %v157
  %v166 = vmul.f32 %v162, %v158
  %v167 = vadd.f32 %v151, %v163
  %v168 = vadd.f32 %v152, %v164
  %v169 = vadd.f32 %v153, %v165
  %v170 = vadd.f32 %v154, %v166
  %v171 = vld [vmem:[%s6] sm:$0xff]
  %v172 = vld [vmem:[%s6 + $0x8] sm:$0xff]
  %v173 = vld [vmem:[%s6 + $0x10] sm:$0xff]
  %v174 = vld [vmem:[%s6 + $0x18] sm:$0xff]
  %v175 = vlaneseq
  %v176 = vshrl.u32 %v175, 7
  %v177 = vsub.s32 0, %v176
  %v178 = vrot.slane %v38, %v177
  %vm179 = vcmask 261120
  %v181 = vsel %vm179, %v167, 0
  %v184 = vsel %vm179, %v168, 0
  %v187 = vsel %vm179, %v169, 0
  %v190 = vsel %vm179, %v170, 0
  %192 = vmatprep.subr.mxu0 0.0
  %193 = vmatpush1.msra.mxu0 %v171
  %194 = vmatprep.subr.mxu0 0.0
  %195 = vmatpush1.msra.mxu0 %v172
  %196 = vmatprep.subr.mxu0 0.0
  %197 = vmatpush1.msra.mxu0 %v173
  %198 = vmatprep.subr.mxu0 0.0
  %199 = vmatpush1.msra.mxu0 %v174
  %200 = vmatprep.subr.mxu0 0.0
  %201 = vmatpush1.msra.mxu0 0.0
  %202 = vmatprep.subr.mxu0 0.0
  %203 = vmatpush1.msra.mxu0 0.0
  %204 = vmatprep.subr.mxu0 0.0
  %205 = vmatpush1.msra.mxu0 0.0
  %206 = vmatprep.subr.mxu0 0.0
  %207 = vmatpush1.msra.mxu0 0.0
  %208 = vmatprep.subr.mxu0 0.0
  %209 = vmatpush1.msra.mxu0 0.0
  %210 = vmatprep.subr.mxu0 0.0
  %211 = vmatpush1.msra.mxu0 0.0
  %212 = vmatprep.subr.mxu0 0.0
  %213 = vmatpush1.msra.mxu0 0.0
  %214 = vmatprep.subr.mxu0 0.0
  %215 = vmatpush1.msra.mxu0 0.0
  %216 = vmatprep.subr.mxu0 0.0
  %217 = vmatpush1.msra.mxu0 0.0
  %218 = vmatprep.subr.mxu0 0.0
  %219 = vmatpush1.msra.mxu0 0.0
  %220 = vmatprep.subr.mxu0 0.0
  %221 = vmatpush1.msra.mxu0 0.0
  %222 = vmatprep.subr.mxu0 0.0
  %223 = vmatpush1.msra.mxu0 0.0
  %224 = vmatprep.subr.mxu0 0.0
  %225 = vmatpush1.msra.mxu0 0.0
  %226 = vmatprep.subr.mxu0 0.0
  %227 = vmatpush1.msra.mxu0 0.0
  %228 = vmatprep.subr.mxu0 0.0
  %229 = vmatpush1.msra.mxu0 0.0
  %230 = vmatprep.subr.mxu0 0.0
  %231 = vmatpush1.msra.mxu0 0.0
  %232 = vmatprep.subr.mxu0 0.0
  %233 = vmatpush1.msra.mxu0 0.0
  %234 = vmatprep.subr.mxu0 0.0
  %235 = vmatpush1.msra.mxu0 0.0
  %236 = vmatprep.subr.mxu0 0.0
  %237 = vmatpush1.msra.mxu0 0.0
  %238 = vmatprep.subr.mxu0 0.0
  %239 = vmatpush1.msra.mxu0 0.0
  %240 = vmatprep.subr.mxu0 0.0
  %241 = vmatpush1.msra.mxu0 0.0
  %242 = vmatprep.subr.mxu0 0.0
  %243 = vmatpush1.msra.mxu0 0.0
  %244 = vmatprep.subr.mxu0 0.0
  %245 = vmatpush1.msra.mxu0 0.0
  %246 = vmatprep.subr.mxu0 0.0
  %247 = vmatpush1.msra.mxu0 0.0
  %248 = vmatprep.subr.mxu0 0.0
  %249 = vmatpush1.msra.mxu0 0.0
  %250 = vmatprep.subr.mxu0 0.0
  %251 = vmatpush1.msra.mxu0 0.0
  %252 = vmatprep.subr.mxu0 0.0
  %253 = vmatpush1.msra.mxu0 0.0
  %254 = vmatprep.subr.mxu0 0.0
  %255 = vmatpush1.msra.mxu0 0.0
  %256 = vmatprep.mubr.f32.mxu0 0.0
  %257 = vmatmul.mubr.f32.gmra.mrb[0].mxu0 %v181
  %v258 = vpop.f32.mrb[0].mxu0
  %v259 = vadd.f32 %v178, %v258
  %v260 = vpop.f32.mrb[0].mxu0
  %261 = vmatprep.mubr.f32.mxu0 0.0
  %262 = vmatmul.mubr.f32.gmra.mrb[0].mxu0 %v184
  %v263 = vpop.f32.mrb[0].mxu0
  %v264 = vadd.f32 %v178, %v263
  %v265 = vpop.f32.mrb[0].mxu0
  %266 = vmatprep.mubr.f32.mxu0 0.0
  %267 = vmatmul.mubr.f32.gmra.mrb[0].mxu0 %v187
  %v268 = vpop.f32.mrb[0].mxu0
  %v269 = vadd.f32 %v178, %v268
  %v270 = vpop.f32.mrb[0].mxu0
  %271 = vmatprep.mubr.f32.mxu0 0.0
  %272 = vmatmul.mubr.f32.gmra.mrb[0].mxu0 %v190
  %v273 = vpop.f32.mrb[0].mxu0
  %v274 = vadd.f32 %v178, %v273
  %v275 = vpop.f32.mrb[0].mxu0
  %276 = vdwg.mxu0
  %279 = vrot.lane.b32.xlu0 %v259, 32
  %v280 = vpop.permute.xlu0 %279
  %281 = vrot.lane.b32.xlu0 %v264, 32
  %v282 = vpop.permute.xlu0 %281
  %v285 = vsel %vm179, %v269, %v280
  %v286 = vsel %vm179, %v274, %v282
  %v287 = vld [vmem:[%s1] sm:$0x3]
  %vm288 = vcmask 130048
  %v290 = vsel %vm288, %v287, 0
  %292 = vmatprep.subr.mxu0 0.0
  %293 = vmatpush1.msra.mxu0 %v285
  %294 = vmatprep.subr.mxu0 0.0
  %295 = vmatpush1.msra.mxu0 %v286
  %296 = vmatprep.subr.mxu0 0.0
  %297 = vmatpush1.msra.mxu0 0.0
  %298 = vmatprep.subr.mxu0 0.0
  %299 = vmatpush1.msra.mxu0 0.0
  %300 = vmatprep.subr.mxu0 0.0
  %301 = vmatpush1.msra.mxu0 0.0
  %302 = vmatprep.subr.mxu0 0.0
  %303 = vmatpush1.msra.mxu0 0.0
  %304 = vmatprep.subr.mxu0 0.0
  %305 = vmatpush1.msra.mxu0 0.0
  %306 = vmatprep.subr.mxu0 0.0
  %307 = vmatpush1.msra.mxu0 0.0
  %308 = vmatprep.subr.mxu0 0.0
  %309 = vmatpush1.msra.mxu0 0.0
  %310 = vmatprep.subr.mxu0 0.0
  %311 = vmatpush1.msra.mxu0 0.0
  %312 = vmatprep.subr.mxu0 0.0
  %313 = vmatpush1.msra.mxu0 0.0
  %314 = vmatprep.subr.mxu0 0.0
  %315 = vmatpush1.msra.mxu0 0.0
  %316 = vmatprep.subr.mxu0 0.0
  %317 = vmatpush1.msra.mxu0 0.0
  %318 = vmatprep.subr.mxu0 0.0
  %319 = vmatpush1.msra.mxu0 0.0
  %320 = vmatprep.subr.mxu0 0.0
  %321 = vmatpush1.msra.mxu0 0.0
  %322 = vmatprep.subr.mxu0 0.0
  %323 = vmatpush1.msra.mxu0 0.0
  %324 = vmatprep.subr.mxu0 0.0
  %325 = vmatpush1.msra.mxu0 0.0
  %326 = vmatprep.subr.mxu0 0.0
  %327 = vmatpush1.msra.mxu0 0.0
  %328 = vmatprep.subr.mxu0 0.0
  %329 = vmatpush1.msra.mxu0 0.0
  %330 = vmatprep.subr.mxu0 0.0
  %331 = vmatpush1.msra.mxu0 0.0
  %332 = vmatprep.subr.mxu0 0.0
  %333 = vmatpush1.msra.mxu0 0.0
  %334 = vmatprep.subr.mxu0 0.0
  %335 = vmatpush1.msra.mxu0 0.0
  %336 = vmatprep.subr.mxu0 0.0
  %337 = vmatpush1.msra.mxu0 0.0
  %338 = vmatprep.subr.mxu0 0.0
  %339 = vmatpush1.msra.mxu0 0.0
  %340 = vmatprep.subr.mxu0 0.0
  %341 = vmatpush1.msra.mxu0 0.0
  %342 = vmatprep.subr.mxu0 0.0
  %343 = vmatpush1.msra.mxu0 0.0
  %344 = vmatprep.subr.mxu0 0.0
  %345 = vmatpush1.msra.mxu0 0.0
  %346 = vmatprep.subr.mxu0 0.0
  %347 = vmatpush1.msra.mxu0 0.0
  %348 = vmatprep.subr.mxu0 0.0
  %349 = vmatpush1.msra.mxu0 0.0
  %350 = vmatprep.subr.mxu0 0.0
  %351 = vmatpush1.msra.mxu0 0.0
  %352 = vmatprep.subr.mxu0 0.0
  %353 = vmatpush1.msra.mxu0 0.0
  %354 = vmatprep.subr.mxu0 0.0
  %355 = vmatpush1.msra.mxu0 0.0
  %356 = vmatprep.mubr.f32.mxu0 0.0
  %357 = vmatmul.mubr.f32.gmra.mrb[0].mxu0 %v290
  %v358 = vpop.f32.mrb[0].mxu0
  %v359 = vadd.f32 0.0, %v358
  %v360 = vpop.f32.mrb[0].mxu0
  %361 = vdwg.mxu0
  %v362 = vld [vmem:[%s5] sm:$0xff]
  %v363 = vld [vmem:[%s5 + $0x8] sm:$0xff]
  %v364 = vld [vmem:[%s5 + $0x10] sm:$0xff]
  %v365 = vld [vmem:[%s5 + $0x18] sm:$0xff]
  %v366 = vld [vmem:[%s5 + $0x20] sm:$0xff]
  %v367 = vld [vmem:[%s5 + $0x28] sm:$0xff]
  %v368 = vld [vmem:[%s5 + $0x30] sm:$0xff]
  %v369 = vld [vmem:[%s5 + $0x38] sm:$0xff]
  %v370 = vlaneseq
  %v371 = vshrl.u32 %v370, 7
  %v372 = vsub.s32 0, %v371
  %v373 = vrot.slane %v39, %v372
  %vm374 = vcmask 523264
  %v376 = vsel %vm374, %v359, 0
  %378 = vmatprep.subr.mxu0 0.0
  %379 = vmatpush1.msra.mxu0 %v362
  %380 = vmatprep.subr.mxu0 0.0
  %381 = vmatpush1.msra.mxu0 %v363
  %382 = vmatprep.subr.mxu0 0.0
  %383 = vmatpush1.msra.mxu0 %v364
  %384 = vmatprep.subr.mxu0 0.0
  %385 = vmatpush1.msra.mxu0 %v365
  %386 = vmatprep.subr.mxu0 0.0
  %387 = vmatpush1.msra.mxu0 %v366
  %388 = vmatprep.subr.mxu0 0.0
  %389 = vmatpush1.msra.mxu0 %v367
  %390 = vmatprep.subr.mxu0 0.0
  %391 = vmatpush1.msra.mxu0 %v368
  %392 = vmatprep.subr.mxu0 0.0
  %393 = vmatpush1.msra.mxu0 %v369
  %394 = vmatprep.subr.mxu0 0.0
  %395 = vmatpush1.msra.mxu0 0.0
  %396 = vmatprep.subr.mxu0 0.0
  %397 = vmatpush1.msra.mxu0 0.0
  %398 = vmatprep.subr.mxu0 0.0
  %399 = vmatpush1.msra.mxu0 0.0
  %400 = vmatprep.subr.mxu0 0.0
  %401 = vmatpush1.msra.mxu0 0.0
  %402 = vmatprep.subr.mxu0 0.0
  %403 = vmatpush1.msra.mxu0 0.0
  %404 = vmatprep.subr.mxu0 0.0
  %405 = vmatpush1.msra.mxu0 0.0
  %406 = vmatprep.subr.mxu0 0.0
  %407 = vmatpush1.msra.mxu0 0.0
  %408 = vmatprep.subr.mxu0 0.0
  %409 = vmatpush1.msra.mxu0 0.0
  %410 = vmatprep.subr.mxu0 0.0
  %411 = vmatpush1.msra.mxu0 0.0
  %412 = vmatprep.subr.mxu0 0.0
  %413 = vmatpush1.msra.mxu0 0.0
  %414 = vmatprep.subr.mxu0 0.0
  %415 = vmatpush1.msra.mxu0 0.0
  %416 = vmatprep.subr.mxu0 0.0
  %417 = vmatpush1.msra.mxu0 0.0
  %418 = vmatprep.subr.mxu0 0.0
  %419 = vmatpush1.msra.mxu0 0.0
  %420 = vmatprep.subr.mxu0 0.0
  %421 = vmatpush1.msra.mxu0 0.0
  %422 = vmatprep.subr.mxu0 0.0
  %423 = vmatpush1.msra.mxu0 0.0
  %424 = vmatprep.subr.mxu0 0.0
  %425 = vmatpush1.msra.mxu0 0.0
  %426 = vmatprep.subr.mxu0 0.0
  %427 = vmatpush1.msra.mxu0 0.0
  %428 = vmatprep.subr.mxu0 0.0
  %429 = vmatpush1.msra.mxu0 0.0
  %430 = vmatprep.subr.mxu0 0.0
  %431 = vmatpush1.msra.mxu0 0.0
  %432 = vmatprep.subr.mxu0 0.0
  %433 = vmatpush1.msra.mxu0 0.0
  %434 = vmatprep.subr.mxu0 0.0
  %435 = vmatpush1.msra.mxu0 0.0
  %436 = vmatprep.subr.mxu0 0.0
  %437 = vmatpush1.msra.mxu0 0.0
  %438 = vmatprep.subr.mxu0 0.0
  %439 = vmatpush1.msra.mxu0 0.0
  %440 = vmatprep.subr.mxu0 0.0
  %441 = vmatpush1.msra.mxu0 0.0
  %442 = vmatprep.mubr.f32.mxu0 0.0
  %443 = vmatmul.mubr.f32.gmra.mrb[0].mxu0 %v376
  %v444 = vpop.f32.mrb[0].mxu0
  %v445 = vadd.f32 %v373, %v444
  %v446 = vpop.f32.mrb[0].mxu0
  %447 = vdwg.mxu0
  %s448 = scalar_lea.vmem %s6, 64
  %v449 = vld [vmem:[%s448] sm:$0xff]
  %v450 = vld [vmem:[%s448 + $0x8] sm:$0xff]
  %v451 = vld [vmem:[%s448 + $0x10] sm:$0xff]
  %v452 = vld [vmem:[%s448 + $0x18] sm:$0xff]
  %v454 = vsel %vm179, %v445, 0
  %456 = vmatprep.subr.mxu0 0.0
  %457 = vmatpush1.msra.mxu0 %v449
  %458 = vmatprep.subr.mxu0 0.0
  %459 = vmatpush1.msra.mxu0 %v450
  %460 = vmatprep.subr.mxu0 0.0
  %461 = vmatpush1.msra.mxu0 %v451
  %462 = vmatprep.subr.mxu0 0.0
  %463 = vmatpush1.msra.mxu0 %v452
  %464 = vmatprep.subr.mxu0 0.0
  %465 = vmatpush1.msra.mxu0 0.0
  %466 = vmatprep.subr.mxu0 0.0
  %467 = vmatpush1.msra.mxu0 0.0
  %468 = vmatprep.subr.mxu0 0.0
  %469 = vmatpush1.msra.mxu0 0.0
  %470 = vmatprep.subr.mxu0 0.0
  %471 = vmatpush1.msra.mxu0 0.0
  %472 = vmatprep.subr.mxu0 0.0
  %473 = vmatpush1.msra.mxu0 0.0
  %474 = vmatprep.subr.mxu0 0.0
  %475 = vmatpush1.msra.mxu0 0.0
  %476 = vmatprep.subr.mxu0 0.0
  %477 = vmatpush1.msra.mxu0 0.0
  %478 = vmatprep.subr.mxu0 0.0
  %479 = vmatpush1.msra.mxu0 0.0
  %480 = vmatprep.subr.mxu0 0.0
  %481 = vmatpush1.msra.mxu0 0.0
  %482 = vmatprep.subr.mxu0 0.0
  %483 = vmatpush1.msra.mxu0 0.0
  %484 = vmatprep.subr.mxu0 0.0
  %485 = vmatpush1.msra.mxu0 0.0
  %486 = vmatprep.subr.mxu0 0.0
  %487 = vmatpush1.msra.mxu0 0.0
  %488 = vmatprep.subr.mxu0 0.0
  %489 = vmatpush1.msra.mxu0 0.0
  %490 = vmatprep.subr.mxu0 0.0
  %491 = vmatpush1.msra.mxu0 0.0
  %492 = vmatprep.subr.mxu0 0.0
  %493 = vmatpush1.msra.mxu0 0.0
  %494 = vmatprep.subr.mxu0 0.0
  %495 = vmatpush1.msra.mxu0 0.0
  %496 = vmatprep.subr.mxu0 0.0
  %497 = vmatpush1.msra.mxu0 0.0
  %498 = vmatprep.subr.mxu0 0.0
  %499 = vmatpush1.msra.mxu0 0.0
  %500 = vmatprep.subr.mxu0 0.0
  %501 = vmatpush1.msra.mxu0 0.0
  %502 = vmatprep.subr.mxu0 0.0
  %503 = vmatpush1.msra.mxu0 0.0
  %504 = vmatprep.subr.mxu0 0.0
  %505 = vmatpush1.msra.mxu0 0.0
  %506 = vmatprep.subr.mxu0 0.0
  %507 = vmatpush1.msra.mxu0 0.0
  %508 = vmatprep.subr.mxu0 0.0
  %509 = vmatpush1.msra.mxu0 0.0
  %510 = vmatprep.subr.mxu0 0.0
  %511 = vmatpush1.msra.mxu0 0.0
  %512 = vmatprep.subr.mxu0 0.0
  %513 = vmatpush1.msra.mxu0 0.0
  %514 = vmatprep.subr.mxu0 0.0
  %515 = vmatpush1.msra.mxu0 0.0
  %516 = vmatprep.subr.mxu0 0.0
  %517 = vmatpush1.msra.mxu0 0.0
  %518 = vmatprep.subr.mxu0 0.0
  %519 = vmatpush1.msra.mxu0 0.0
  %520 = vmatprep.mubr.f32.mxu0 0.0
  %521 = vmatmul.mubr.f32.gmra.mrb[0].mxu0 %v454
  %v522 = vpop.f32.mrb[0].mxu0
  %v523 = vadd.f32 0.0, %v522
  %v524 = vpop.f32.mrb[0].mxu0
  %525 = vdwg.mxu0
  %v526 = vld [vmem:[%s3] sm:$0xff]
  %v527 = vld [vmem:[%s3 + $0x8] sm:$0xff]
  %v528 = vld [vmem:[%s3 + $0x10] sm:$0xff]
  %v529 = vld [vmem:[%s3 + $0x18] sm:$0xff]
  %v530 = vld [vmem:[%s3 + $0x20] sm:$0xff]
  %v531 = vld [vmem:[%s3 + $0x28] sm:$0xff]
  %v532 = vld [vmem:[%s3 + $0x30] sm:$0xff]
  %v533 = vld [vmem:[%s3 + $0x38] sm:$0xff]
  %v534 = vld [vmem:[%s3 + $0x40] sm:$0xff]
  %v535 = vld [vmem:[%s3 + $0x48] sm:$0xff]
  %v536 = vld [vmem:[%s3 + $0x50] sm:$0xff]
  %v537 = vld [vmem:[%s3 + $0x58] sm:$0xff]
  %v538 = vld [vmem:[%s3 + $0x60] sm:$0x3f]
  %s539 = scalar_lea.vmem %s6, 32
  %v540 = vld [vmem:[%s539] sm:$0xff]
  %v541 = vld [vmem:[%s539 + $0x8] sm:$0xff]
  %v542 = vld [vmem:[%s539 + $0x10] sm:$0xff]
  %v543 = vld [vmem:[%s539 + $0x18] sm:$0xff]
  %v544 = vld [vmem:[%s2] sm:$0xff]
  %v545 = vld [vmem:[%s2 + $0x8] sm:$0xff]
  %v546 = vld [vmem:[%s2 + $0x10] sm:$0xff]
  %v547 = vld [vmem:[%s2 + $0x18] sm:$0xff]
  %v548 = vld [vmem:[%s2 + $0x20] sm:$0xff]
  %v549 = vld [vmem:[%s2 + $0x28] sm:$0xff]
  %v550 = vld [vmem:[%s2 + $0x30] sm:$0xff]
  %v551 = vld [vmem:[%s2 + $0x38] sm:$0xff]
  %v552 = vld [vmem:[%s2 + $0x40] sm:$0xff]
  %v553 = vld [vmem:[%s2 + $0x48] sm:$0xff]
  %v554 = vld [vmem:[%s2 + $0x50] sm:$0xff]
  %v555 = vld [vmem:[%s2 + $0x58] sm:$0xff]
  %v556 = vld [vmem:[%s2 + $0x60] sm:$0x3f]
  %vm557 = vcmask 15360
  %v559 = vsel %vm557, %v544, 0
  %v562 = vsel %vm557, %v545, 0
  %v565 = vsel %vm557, %v546, 0
  %v568 = vsel %vm557, %v547, 0
  %v571 = vsel %vm557, %v548, 0
  %v574 = vsel %vm557, %v549, 0
  %v577 = vsel %vm557, %v550, 0
  %v580 = vsel %vm557, %v551, 0
  %v583 = vsel %vm557, %v552, 0
  %v586 = vsel %vm557, %v553, 0
  %v589 = vsel %vm557, %v554, 0
  %v592 = vsel %vm557, %v555, 0
  %v595 = vsel %vm557, %v556, 0
  %vm597 = vcmask 1041408
  %v599 = vsel %vm597, %v523, 0
  %601 = vmatprep.subr.mxu0 0.0
  %602 = vmatpush1.msra.mxu0 %v599
  %603 = vmatprep.subr.mxu0 0.0
  %604 = vmatpush1.msra.mxu0 0.0
  %605 = vmatprep.subr.mxu0 0.0
  %606 = vmatpush1.msra.mxu0 0.0
  %607 = vmatprep.subr.mxu0 0.0
  %608 = vmatpush1.msra.mxu0 0.0
  %609 = vmatprep.subr.mxu0 0.0
  %610 = vmatpush1.msra.mxu0 0.0
  %611 = vmatprep.subr.mxu0 0.0
  %612 = vmatpush1.msra.mxu0 0.0
  %613 = vmatprep.subr.mxu0 0.0
  %614 = vmatpush1.msra.mxu0 0.0
  %615 = vmatprep.subr.mxu0 0.0
  %616 = vmatpush1.msra.mxu0 0.0
  %617 = vmatprep.subr.mxu0 0.0
  %618 = vmatpush1.msra.mxu0 0.0
  %619 = vmatprep.subr.mxu0 0.0
  %620 = vmatpush1.msra.mxu0 0.0
  %621 = vmatprep.subr.mxu0 0.0
  %622 = vmatpush1.msra.mxu0 0.0
  %623 = vmatprep.subr.mxu0 0.0
  %624 = vmatpush1.msra.mxu0 0.0
  %625 = vmatprep.subr.mxu0 0.0
  %626 = vmatpush1.msra.mxu0 0.0
  %627 = vmatprep.subr.mxu0 0.0
  %628 = vmatpush1.msra.mxu0 0.0
  %629 = vmatprep.subr.mxu0 0.0
  %630 = vmatpush1.msra.mxu0 0.0
  %631 = vmatprep.subr.mxu0 0.0
  %632 = vmatpush1.msra.mxu0 0.0
  %633 = vmatprep.subr.mxu0 0.0
  %634 = vmatpush1.msra.mxu0 0.0
  %635 = vmatprep.subr.mxu0 0.0
  %636 = vmatpush1.msra.mxu0 0.0
  %637 = vmatprep.subr.mxu0 0.0
  %638 = vmatpush1.msra.mxu0 0.0
  %639 = vmatprep.subr.mxu0 0.0
  %640 = vmatpush1.msra.mxu0 0.0
  %641 = vmatprep.subr.mxu0 0.0
  %642 = vmatpush1.msra.mxu0 0.0
  %643 = vmatprep.subr.mxu0 0.0
  %644 = vmatpush1.msra.mxu0 0.0
  %645 = vmatprep.subr.mxu0 0.0
  %646 = vmatpush1.msra.mxu0 0.0
  %647 = vmatprep.subr.mxu0 0.0
  %648 = vmatpush1.msra.mxu0 0.0
  %649 = vmatprep.subr.mxu0 0.0
  %650 = vmatpush1.msra.mxu0 0.0
  %651 = vmatprep.subr.mxu0 0.0
  %652 = vmatpush1.msra.mxu0 0.0
  %653 = vmatprep.subr.mxu0 0.0
  %654 = vmatpush1.msra.mxu0 0.0
  %655 = vmatprep.subr.mxu0 0.0
  %656 = vmatpush1.msra.mxu0 0.0
  %657 = vmatprep.subr.mxu0 0.0
  %658 = vmatpush1.msra.mxu0 0.0
  %659 = vmatprep.subr.mxu0 0.0
  %660 = vmatpush1.msra.mxu0 0.0
  %661 = vmatprep.subr.mxu0 0.0
  %662 = vmatpush1.msra.mxu0 0.0
  %663 = vmatprep.subr.mxu0 0.0
  %664 = vmatpush1.msra.mxu0 0.0
  %665 = vmatprep.mubr.f32.mxu0 0.0
  %666 = vmatmul.mubr.f32.gmra.mrb[0].mxu0 %v559
  %v667 = vpop.f32.mrb[0].mxu0
  %v668 = vadd.f32 0.0, %v667
  %v669 = vpop.f32.mrb[0].mxu0
  %670 = vmatprep.mubr.f32.mxu0 0.0
  %671 = vmatmul.mubr.f32.gmra.mrb[0].mxu0 %v562
  %v672 = vpop.f32.mrb[0].mxu0
  %v673 = vadd.f32 0.0, %v672
  %v674 = vpop.f32.mrb[0].mxu0
  %675 = vmatprep.mubr.f32.mxu0 0.0
  %676 = vmatmul.mubr.f32.gmra.mrb[0].mxu0 %v565
  %v677 = vpop.f32.mrb[0].mxu0
  %v678 = vadd.f32 0.0, %v677
  %v679 = vpop.f32.mrb[0].mxu0
  %680 = vmatprep.mubr.f32.mxu0 0.0
  %681 = vmatmul.mubr.f32.gmra.mrb[0].mxu0 %v568
  %v682 = vpop.f32.mrb[0].mxu0
  %v683 = vadd.f32 0.0, %v682
  %v684 = vpop.f32.mrb[0].mxu0
  %685 = vmatprep.mubr.f32.mxu0 0.0
  %686 = vmatmul.mubr.f32.gmra.mrb[0].mxu0 %v571
  %v687 = vpop.f32.mrb[0].mxu0
  %v688 = vadd.f32 0.0, %v687
  %v689 = vpop.f32.mrb[0].mxu0
  %690 = vmatprep.mubr.f32.mxu0 0.0
  %691 = vmatmul.mubr.f32.gmra.mrb[0].mxu0 %v574
  %v692 = vpop.f32.mrb[0].mxu0
  %v693 = vadd.f32 0.0, %v692
  %v694 = vpop.f32.mrb[0].mxu0
  %695 = vmatprep.mubr.f32.mxu0 0.0
  %696 = vmatmul.mubr.f32.gmra.mrb[0].mxu0 %v577
  %v697 = vpop.f32.mrb[0].mxu0
  %v698 = vadd.f32 0.0, %v697
  %v699 = vpop.f32.mrb[0].mxu0
  %700 = vmatprep.mubr.f32.mxu0 0.0
  %701 = vmatmul.mubr.f32.gmra.mrb[0].mxu0 %v580
  %v702 = vpop.f32.mrb[0].mxu0
  %v703 = vadd.f32 0.0, %v702
  %v704 = vpop.f32.mrb[0].mxu0
  %705 = vmatprep.mubr.f32.mxu0 0.0
  %706 = vmatmul.mubr.f32.gmra.mrb[0].mxu0 %v583
  %v707 = vpop.f32.mrb[0].mxu0
  %v708 = vadd.f32 0.0, %v707
  %v709 = vpop.f32.mrb[0].mxu0
  %710 = vmatprep.mubr.f32.mxu0 0.0
  %711 = vmatmul.mubr.f32.gmra.mrb[0].mxu0 %v586
  %v712 = vpop.f32.mrb[0].mxu0
  %v713 = vadd.f32 0.0, %v712
  %v714 = vpop.f32.mrb[0].mxu0
  %715 = vmatprep.mubr.f32.mxu0 0.0
  %716 = vmatmul.mubr.f32.gmra.mrb[0].mxu0 %v589
  %v717 = vpop.f32.mrb[0].mxu0
  %v718 = vadd.f32 0.0, %v717
  %v719 = vpop.f32.mrb[0].mxu0
  %720 = vmatprep.mubr.f32.mxu0 0.0
  %721 = vmatmul.mubr.f32.gmra.mrb[0].mxu0 %v592
  %v722 = vpop.f32.mrb[0].mxu0
  %v723 = vadd.f32 0.0, %v722
  %v724 = vpop.f32.mrb[0].mxu0
  %725 = vmatprep.mubr.f32.mxu0 0.0
  %726 = vmatmul.mubr.f32.gmra.mrb[0].mxu0 %v595
  %v727 = vpop.f32.mrb[0].mxu0
  %v728 = vadd.f32 0.0, %v727
  %v729 = vpop.f32.mrb[0].mxu0
  %730 = vdwg.mxu0
  %v732 = vsel %vm179, %v526, 0
  %v735 = vsel %vm179, %v527, 0
  %v738 = vsel %vm179, %v528, 0
  %v741 = vsel %vm179, %v529, 0
  %v744 = vsel %vm179, %v530, 0
  %v747 = vsel %vm179, %v531, 0
  %v750 = vsel %vm179, %v532, 0
  %v753 = vsel %vm179, %v533, 0
  %v756 = vsel %vm179, %v534, 0
  %v759 = vsel %vm179, %v535, 0
  %v762 = vsel %vm179, %v536, 0
  %v765 = vsel %vm179, %v537, 0
  %v768 = vsel %vm179, %v538, 0
  %770 = vmatprep.subr.mxu0 0.0
  %771 = vmatpush1.msra.mxu0 %v540
  %772 = vmatprep.subr.mxu0 0.0
  %773 = vmatpush1.msra.mxu0 %v541
  %774 = vmatprep.subr.mxu0 0.0
  %775 = vmatpush1.msra.mxu0 %v542
  %776 = vmatprep.subr.mxu0 0.0
  %777 = vmatpush1.msra.mxu0 %v543
  %778 = vmatprep.subr.mxu0 0.0
  %779 = vmatpush1.msra.mxu0 0.0
  %780 = vmatprep.subr.mxu0 0.0
  %781 = vmatpush1.msra.mxu0 0.0
  %782 = vmatprep.subr.mxu0 0.0
  %783 = vmatpush1.msra.mxu0 0.0
  %784 = vmatprep.subr.mxu0 0.0
  %785 = vmatpush1.msra.mxu0 0.0
  %786 = vmatprep.subr.mxu0 0.0
  %787 = vmatpush1.msra.mxu0 0.0
  %788 = vmatprep.subr.mxu0 0.0
  %789 = vmatpush1.msra.mxu0 0.0
  %790 = vmatprep.subr.mxu0 0.0
  %791 = vmatpush1.msra.mxu0 0.0
  %792 = vmatprep.subr.mxu0 0.0
  %793 = vmatpush1.msra.mxu0 0.0
  %794 = vmatprep.subr.mxu0 0.0
  %795 = vmatpush1.msra.mxu0 0.0
  %796 = vmatprep.subr.mxu0 0.0
  %797 = vmatpush1.msra.mxu0 0.0
  %798 = vmatprep.subr.mxu0 0.0
  %799 = vmatpush1.msra.mxu0 0.0
  %800 = vmatprep.subr.mxu0 0.0
  %801 = vmatpush1.msra.mxu0 0.0
  %802 = vmatprep.subr.mxu0 0.0
  %803 = vmatpush1.msra.mxu0 0.0
  %804 = vmatprep.subr.mxu0 0.0
  %805 = vmatpush1.msra.mxu0 0.0
  %806 = vmatprep.subr.mxu0 0.0
  %807 = vmatpush1.msra.mxu0 0.0
  %808 = vmatprep.subr.mxu0 0.0
  %809 = vmatpush1.msra.mxu0 0.0
  %810 = vmatprep.subr.mxu0 0.0
  %811 = vmatpush1.msra.mxu0 0.0
  %812 = vmatprep.subr.mxu0 0.0
  %813 = vmatpush1.msra.mxu0 0.0
  %814 = vmatprep.subr.mxu0 0.0
  %815 = vmatpush1.msra.mxu0 0.0
  %816 = vmatprep.subr.mxu0 0.0
  %817 = vmatpush1.msra.mxu0 0.0
  %818 = vmatprep.subr.mxu0 0.0
  %819 = vmatpush1.msra.mxu0 0.0
  %820 = vmatprep.subr.mxu0 0.0
  %821 = vmatpush1.msra.mxu0 0.0
  %822 = vmatprep.subr.mxu0 0.0
  %823 = vmatpush1.msra.mxu0 0.0
  %824 = vmatprep.subr.mxu0 0.0
  %825 = vmatpush1.msra.mxu0 0.0
  %826 = vmatprep.subr.mxu0 0.0
  %827 = vmatpush1.msra.mxu0 0.0
  %828 = vmatprep.subr.mxu0 0.0
  %829 = vmatpush1.msra.mxu0 0.0
  %830 = vmatprep.subr.mxu0 0.0
  %831 = vmatpush1.msra.mxu0 0.0
  %832 = vmatprep.subr.mxu0 0.0
  %833 = vmatpush1.msra.mxu0 0.0
  %834 = vmatprep.mubr.f32.mxu0 0.0
  %835 = vmatmul.mubr.f32.gmra.mrb[0].mxu0 %v732
  %v836 = vpop.f32.mrb[0].mxu0
  %v837 = vadd.f32 %v668, %v836
  %v838 = vpop.f32.mrb[0].mxu0
  %839 = vmatprep.mubr.f32.mxu0 0.0
  %840 = vmatmul.mubr.f32.gmra.mrb[0].mxu0 %v735
  %v841 = vpop.f32.mrb[0].mxu0
  %v842 = vadd.f32 %v673, %v841
  %v843 = vpop.f32.mrb[0].mxu0
  %844 = vmatprep.mubr.f32.mxu0 0.0
  %845 = vmatmul.mubr.f32.gmra.mrb[0].mxu0 %v738
  %v846 = vpop.f32.mrb[0].mxu0
  %v847 = vadd.f32 %v678, %v846
  %v848 = vpop.f32.mrb[0].mxu0
  %849 = vmatprep.mubr.f32.mxu0 0.0
  %850 = vmatmul.mubr.f32.gmra.mrb[0].mxu0 %v741
  %v851 = vpop.f32.mrb[0].mxu0
  %v852 = vadd.f32 %v683, %v851
  %v853 = vpop.f32.mrb[0].mxu0
  %854 = vmatprep.mubr.f32.mxu0 0.0
  %855 = vmatmul.mubr.f32.gmra.mrb[0].mxu0 %v744
  %v856 = vpop.f32.mrb[0].mxu0
  %v857 = vadd.f32 %v688, %v856
  %v858 = vpop.f32.mrb[0].mxu0
  %859 = vmatprep.mubr.f32.mxu0 0.0
  %860 = vmatmul.mubr.f32.gmra.mrb[0].mxu0 %v747
  %v861 = vpop.f32.mrb[0].mxu0
  %v862 = vadd.f32 %v693, %v861
  %v863 = vpop.f32.mrb[0].mxu0
  %864 = vmatprep.mubr.f32.mxu0 0.0
  %865 = vmatmul.mubr.f32.gmra.mrb[0].mxu0 %v750
  %v866 = vpop.f32.mrb[0].mxu0
  %v867 = vadd.f32 %v698, %v866
  %v868 = vpop.f32.mrb[0].mxu0
  %869 = vmatprep.mubr.f32.mxu0 0.0
  %870 = vmatmul.mubr.f32.gmra.mrb[0].mxu0 %v753
  %v871 = vpop.f32.mrb[0].mxu0
  %v872 = vadd.f32 %v703, %v871
  %v873 = vpop.f32.mrb[0].mxu0
  %874 = vmatprep.mubr.f32.mxu0 0.0
  %875 = vmatmul.mubr.f32.gmra.mrb[0].mxu0 %v756
  %v876 = vpop.f32.mrb[0].mxu0
  %v877 = vadd.f32 %v708, %v876
  %v878 = vpop.f32.mrb[0].mxu0
  %879 = vmatprep.mubr.f32.mxu0 0.0
  %880 = vmatmul.mubr.f32.gmra.mrb[0].mxu0 %v759
  %v881 = vpop.f32.mrb[0].mxu0
  %v882 = vadd.f32 %v713, %v881
  %v883 = vpop.f32.mrb[0].mxu0
  %884 = vmatprep.mubr.f32.mxu0 0.0
  %885 = vmatmul.mubr.f32.gmra.mrb[0].mxu0 %v762
  %v886 = vpop.f32.mrb[0].mxu0
  %v887 = vadd.f32 %v718, %v886
  %v888 = vpop.f32.mrb[0].mxu0
  %889 = vmatprep.mubr.f32.mxu0 0.0
  %890 = vmatmul.mubr.f32.gmra.mrb[0].mxu0 %v765
  %v891 = vpop.f32.mrb[0].mxu0
  %v892 = vadd.f32 %v723, %v891
  %v893 = vpop.f32.mrb[0].mxu0
  %894 = vmatprep.mubr.f32.mxu0 0.0
  %895 = vmatmul.mubr.f32.gmra.mrb[0].mxu0 %v768
  %v896 = vpop.f32.mrb[0].mxu0
  %v897 = vadd.f32 %v728, %v896
  %v898 = vpop.f32.mrb[0].mxu0
  %899 = vdwg.mxu0
  %v900 = vlaneseq
  %v901 = vshrl.u32 %v900, 7
  %v902 = vsub.s32 0, %v901
  %v903 = vrot.slane %v40, %v902
  %v904 = vadd.f32 %v837, %v903
  %v905 = vadd.f32 %v842, %v903
  %v906 = vadd.f32 %v847, %v903
  %v907 = vadd.f32 %v852, %v903
  %v908 = vadd.f32 %v857, %v903
  %v909 = vadd.f32 %v862, %v903
  %v910 = vadd.f32 %v867, %v903
  %v911 = vadd.f32 %v872, %v903
  %v912 = vadd.f32 %v877, %v903
  %v913 = vadd.f32 %v882, %v903
  %v914 = vadd.f32 %v887, %v903
  %v915 = vadd.f32 %v892, %v903
  %v916 = vadd.f32 %v897, %v903
  %v917 = vsel %vm179, %v904, 0.0
  %918 = vadd.xlane.f32.xlu0 %v917
  %v919 = vpop.xlane.xlu0 %918
  %v920 = vsel %vm179, %v905, 0.0
  %921 = vadd.xlane.f32.xlu0 %v920
  %v922 = vpop.xlane.xlu0 %921
  %v923 = vsel %vm179, %v906, 0.0
  %924 = vadd.xlane.f32.xlu0 %v923
  %v925 = vpop.xlane.xlu0 %924
  %v926 = vsel %vm179, %v907, 0.0
  %927 = vadd.xlane.f32.xlu0 %v926
  %v928 = vpop.xlane.xlu0 %927
  %v929 = vsel %vm179, %v908, 0.0
  %930 = vadd.xlane.f32.xlu0 %v929
  %v931 = vpop.xlane.xlu0 %930
  %v932 = vsel %vm179, %v909, 0.0
  %933 = vadd.xlane.f32.xlu0 %v932
  %v934 = vpop.xlane.xlu0 %933
  %v935 = vsel %vm179, %v910, 0.0
  %936 = vadd.xlane.f32.xlu0 %v935
  %v937 = vpop.xlane.xlu0 %936
  %v938 = vsel %vm179, %v911, 0.0
  %939 = vadd.xlane.f32.xlu0 %v938
  %v940 = vpop.xlane.xlu0 %939
  %v941 = vsel %vm179, %v912, 0.0
  %942 = vadd.xlane.f32.xlu0 %v941
  %v943 = vpop.xlane.xlu0 %942
  %v944 = vsel %vm179, %v913, 0.0
  %945 = vadd.xlane.f32.xlu0 %v944
  %v946 = vpop.xlane.xlu0 %945
  %v947 = vsel %vm179, %v914, 0.0
  %948 = vadd.xlane.f32.xlu0 %v947
  %v949 = vpop.xlane.xlu0 %948
  %v950 = vsel %vm179, %v915, 0.0
  %951 = vadd.xlane.f32.xlu0 %v950
  %v952 = vpop.xlane.xlu0 %951
  %vm953 = vcmask 259072
  %v954 = vsel %vm953, %v916, 0.0
  %955 = vadd.xlane.f32.xlu0 %v954
  %v956 = vpop.xlane.xlu0 %955
  %v957 = vrcp.pop 32.0
  %v958 = vmul.f32 %v919, %v957
  %v959 = vmul.f32 %v922, %v957
  %v960 = vmul.f32 %v925, %v957
  %v961 = vmul.f32 %v928, %v957
  %v962 = vmul.f32 %v931, %v957
  %v963 = vmul.f32 %v934, %v957
  %v964 = vmul.f32 %v937, %v957
  %v965 = vmul.f32 %v940, %v957
  %v966 = vmul.f32 %v943, %v957
  %v967 = vmul.f32 %v946, %v957
  %v968 = vmul.f32 %v949, %v957
  %v969 = vmul.f32 %v952, %v957
  %v970 = vmul.f32 %v956, %v957
  %v971 = vsub.f32 %v904, %v958
  %v972 = vsub.f32 %v905, %v959
  %v973 = vsub.f32 %v906, %v960
  %v974 = vsub.f32 %v907, %v961
  %v975 = vsub.f32 %v908, %v962
  %v976 = vsub.f32 %v909, %v963
  %v977 = vsub.f32 %v910, %v964
  %v978 = vsub.f32 %v911, %v965
  %v979 = vsub.f32 %v912, %v966
  %v980 = vsub.f32 %v913, %v967
  %v981 = vsub.f32 %v914, %v968
  %v982 = vsub.f32 %v915, %v969
  %v983 = vsub.f32 %v916, %v970
  %v984 = vmul.f32 %v971, %v971
  %v985 = vmul.f32 %v972, %v972
  %v986 = vmul.f32 %v973, %v973
  %v987 = vmul.f32 %v974, %v974
  %v988 = vmul.f32 %v975, %v975
  %v989 = vmul.f32 %v976, %v976
  %v990 = vmul.f32 %v977, %v977
  %v991 = vmul.f32 %v978, %v978
  %v992 = vmul.f32 %v979, %v979
  %v993 = vmul.f32 %v980, %v980
  %v994 = vmul.f32 %v981, %v981
  %v995 = vmul.f32 %v982, %v982
  %v996 = vmul.f32 %v983, %v983
  %v997 = vsel %vm179, %v984, 0.0
  %998 = vadd.xlane.f32.xlu0 %v997
  %v999 = vpop.xlane.xlu0 %998
  %v1000 = vsel %vm179, %v985, 0.0
  %1001 = vadd.xlane.f32.xlu0 %v1000
  %v1002 = vpop.xlane.xlu0 %1001
  %v1003 = vsel %vm179, %v986, 0.0
  %1004 = vadd.xlane.f32.xlu0 %v1003
  %v1005 = vpop.xlane.xlu0 %1004
  %v1006 = vsel %vm179, %v987, 0.0
  %1007 = vadd.xlane.f32.xlu0 %v1006
  %v1008 = vpop.xlane.xlu0 %1007
  %v1009 = vsel %vm179, %v988, 0.0
  %1010 = vadd.xlane.f32.xlu0 %v1009
  %v1011 = vpop.xlane.xlu0 %1010
  %v1012 = vsel %vm179, %v989, 0.0
  %1013 = vadd.xlane.f32.xlu0 %v1012
  %v1014 = vpop.xlane.xlu0 %1013
  %v1015 = vsel %vm179, %v990, 0.0
  %1016 = vadd.xlane.f32.xlu0 %v1015
  %v1017 = vpop.xlane.xlu0 %1016
  %v1018 = vsel %vm179, %v991, 0.0
  %1019 = vadd.xlane.f32.xlu0 %v1018
  %v1020 = vpop.xlane.xlu0 %1019
  %v1021 = vsel %vm179, %v992, 0.0
  %1022 = vadd.xlane.f32.xlu0 %v1021
  %v1023 = vpop.xlane.xlu0 %1022
  %v1024 = vsel %vm179, %v993, 0.0
  %1025 = vadd.xlane.f32.xlu0 %v1024
  %v1026 = vpop.xlane.xlu0 %1025
  %v1027 = vsel %vm179, %v994, 0.0
  %1028 = vadd.xlane.f32.xlu0 %v1027
  %v1029 = vpop.xlane.xlu0 %1028
  %v1030 = vsel %vm179, %v995, 0.0
  %1031 = vadd.xlane.f32.xlu0 %v1030
  %v1032 = vpop.xlane.xlu0 %1031
  %v1033 = vsel %vm953, %v996, 0.0
  %1034 = vadd.xlane.f32.xlu0 %v1033
  %v1035 = vpop.xlane.xlu0 %1034
  %v1036 = vmul.f32 %v999, %v957
  %v1037 = vmul.f32 %v1002, %v957
  %v1038 = vmul.f32 %v1005, %v957
  %v1039 = vmul.f32 %v1008, %v957
  %v1040 = vmul.f32 %v1011, %v957
  %v1041 = vmul.f32 %v1014, %v957
  %v1042 = vmul.f32 %v1017, %v957
  %v1043 = vmul.f32 %v1020, %v957
  %v1044 = vmul.f32 %v1023, %v957
  %v1045 = vmul.f32 %v1026, %v957
  %v1046 = vmul.f32 %v1029, %v957
  %v1047 = vmul.f32 %v1032, %v957
  %v1048 = vmul.f32 %v1035, %v957
  %v1049 = vadd.f32 %v1036, 1e-05
  %v1050 = vadd.f32 %v1037, 1e-05
  %v1051 = vadd.f32 %v1038, 1e-05
  %v1052 = vadd.f32 %v1039, 1e-05
  %v1053 = vadd.f32 %v1040, 1e-05
  %v1054 = vadd.f32 %v1041, 1e-05
  %v1055 = vadd.f32 %v1042, 1e-05
  %v1056 = vadd.f32 %v1043, 1e-05
  %v1057 = vadd.f32 %v1044, 1e-05
  %v1058 = vadd.f32 %v1045, 1e-05
  %v1059 = vadd.f32 %v1046, 1e-05
  %v1060 = vadd.f32 %v1047, 1e-05
  %v1061 = vadd.f32 %v1048, 1e-05
  %v1062 = vrsqrt.pop %v1049
  %v1063 = vrsqrt.pop %v1050
  %v1064 = vrsqrt.pop %v1051
  %v1065 = vrsqrt.pop %v1052
  %v1066 = vrsqrt.pop %v1053
  %v1067 = vrsqrt.pop %v1054
  %v1068 = vrsqrt.pop %v1055
  %v1069 = vrsqrt.pop %v1056
  %v1070 = vrsqrt.pop %v1057
  %v1071 = vrsqrt.pop %v1058
  %v1072 = vrsqrt.pop %v1059
  %v1073 = vrsqrt.pop %v1060
  %v1074 = vrsqrt.pop %v1061
  %v1075 = vmul.f32 %v971, %v1062
  %v1076 = vmul.f32 %v972, %v1063
  %v1077 = vmul.f32 %v973, %v1064
  %v1078 = vmul.f32 %v974, %v1065
  %v1079 = vmul.f32 %v975, %v1066
  %v1080 = vmul.f32 %v976, %v1067
  %v1081 = vmul.f32 %v977, %v1068
  %v1082 = vmul.f32 %v978, %v1069
  %v1083 = vmul.f32 %v979, %v1070
  %v1084 = vmul.f32 %v980, %v1071
  %v1085 = vmul.f32 %v981, %v1072
  %v1086 = vmul.f32 %v982, %v1073
  %v1087 = vmul.f32 %v983, %v1074
  %v1088 = vlaneseq
  %v1089 = vshrl.u32 %v1088, 7
  %v1090 = vsub.s32 0, %v1089
  %v1091 = vrot.slane %v41, %v1090
  %v1092 = vmul.f32 %v1075, %v1091
  %v1093 = vmul.f32 %v1076, %v1091
  %v1094 = vmul.f32 %v1077, %v1091
  %v1095 = vmul.f32 %v1078, %v1091
  %v1096 = vmul.f32 %v1079, %v1091
  %v1097 = vmul.f32 %v1080, %v1091
  %v1098 = vmul.f32 %v1081, %v1091
  %v1099 = vmul.f32 %v1082, %v1091
  %v1100 = vmul.f32 %v1083, %v1091
  %v1101 = vmul.f32 %v1084, %v1091
  %v1102 = vmul.f32 %v1085, %v1091
  %v1103 = vmul.f32 %v1086, %v1091
  %v1104 = vmul.f32 %v1087, %v1091
  %v1105 = vlaneseq
  %v1106 = vshrl.u32 %v1105, 7
  %v1107 = vsub.s32 0, %v1106
  %v1108 = vrot.slane %v42, %v1107
  %v1109 = vadd.f32 %v1092, %v1108
  %v1110 = vadd.f32 %v1093, %v1108
  %v1111 = vadd.f32 %v1094, %v1108
  %v1112 = vadd.f32 %v1095, %v1108
  %v1113 = vadd.f32 %v1096, %v1108
  %v1114 = vadd.f32 %v1097, %v1108
  %v1115 = vadd.f32 %v1098, %v1108
  %v1116 = vadd.f32 %v1099, %v1108
  %v1117 = vadd.f32 %v1100, %v1108
  %v1118 = vadd.f32 %v1101, %v1108
  %v1119 = vadd.f32 %v1102, %v1108
  %v1120 = vadd.f32 %v1103, %v1108
  %v1121 = vadd.f32 %v1104, %v1108
  %v1122 = vmax.f32 %v1109, 0.0
  %v1123 = vmax.f32 %v1110, 0.0
  %v1124 = vmax.f32 %v1111, 0.0
  %v1125 = vmax.f32 %v1112, 0.0
  %v1126 = vmax.f32 %v1113, 0.0
  %v1127 = vmax.f32 %v1114, 0.0
  %v1128 = vmax.f32 %v1115, 0.0
  %v1129 = vmax.f32 %v1116, 0.0
  %v1130 = vmax.f32 %v1117, 0.0
  %v1131 = vmax.f32 %v1118, 0.0
  %v1132 = vmax.f32 %v1119, 0.0
  %v1133 = vmax.f32 %v1120, 0.0
  %v1134 = vmax.f32 %v1121, 0.0
  %v1135 = vmin.f32 %v1109, 0.0
  %v1136 = vmin.f32 %v1110, 0.0
  %v1137 = vmin.f32 %v1111, 0.0
  %v1138 = vmin.f32 %v1112, 0.0
  %v1139 = vmin.f32 %v1113, 0.0
  %v1140 = vmin.f32 %v1114, 0.0
  %v1141 = vmin.f32 %v1115, 0.0
  %v1142 = vmin.f32 %v1116, 0.0
  %v1143 = vmin.f32 %v1117, 0.0
  %v1144 = vmin.f32 %v1118, 0.0
  %v1145 = vmin.f32 %v1119, 0.0
  %v1146 = vmin.f32 %v1120, 0.0
  %v1147 = vmin.f32 %v1121, 0.0
  %v1148 = vlaneseq
  %v1149 = vshrl.u32 %v1148, 7
  %v1150 = vsub.s32 0, %v1149
  %v1151 = vrot.slane %v43, %v1150
  %v1152 = vmul.f32 %v1151, %v1135
  %v1153 = vmul.f32 %v1151, %v1136
  %v1154 = vmul.f32 %v1151, %v1137
  %v1155 = vmul.f32 %v1151, %v1138
  %v1156 = vmul.f32 %v1151, %v1139
  %v1157 = vmul.f32 %v1151, %v1140
  %v1158 = vmul.f32 %v1151, %v1141
  %v1159 = vmul.f32 %v1151, %v1142
  %v1160 = vmul.f32 %v1151, %v1143
  %v1161 = vmul.f32 %v1151, %v1144
  %v1162 = vmul.f32 %v1151, %v1145
  %v1163 = vmul.f32 %v1151, %v1146
  %v1164 = vmul.f32 %v1151, %v1147
  %v1165 = vadd.f32 %v1122, %v1152
  %v1166 = vadd.f32 %v1123, %v1153
  %v1167 = vadd.f32 %v1124, %v1154
  %v1168 = vadd.f32 %v1125, %v1155
  %v1169 = vadd.f32 %v1126, %v1156
  %v1170 = vadd.f32 %v1127, %v1157
  %v1171 = vadd.f32 %v1128, %v1158
  %v1172 = vadd.f32 %v1129, %v1159
  %v1173 = vadd.f32 %v1130, %v1160
  %v1174 = vadd.f32 %v1131, %v1161
  %v1175 = vadd.f32 %v1132, %v1162
  %v1176 = vadd.f32 %v1133, %v1163
  %v1177 = vadd.f32 %v1134, %v1164
  %s1178 = scalar_lea.vmem %s6, 96
  %v1179 = vld [vmem:[%s1178] sm:$0xff]
  %v1180 = vld [vmem:[%s1178 + $0x8] sm:$0xff]
  %v1181 = vld [vmem:[%s1178 + $0x10] sm:$0xff]
  %v1182 = vld [vmem:[%s1178 + $0x18] sm:$0xff]
  %v1183 = vld [vmem:[%s8 + $0x8] sm:$0x1]
  %v1184 = vlaneseq
  %v1185 = vshrl.u32 %v1184, 7
  %v1186 = vsub.s32 0, %v1185
  %v1187 = vrot.slane %v1183, %v1186
  %v1189 = vsel %vm179, %v1165, 0
  %v1192 = vsel %vm179, %v1166, 0
  %v1195 = vsel %vm179, %v1167, 0
  %v1198 = vsel %vm179, %v1168, 0
  %v1201 = vsel %vm179, %v1169, 0
  %v1204 = vsel %vm179, %v1170, 0
  %v1207 = vsel %vm179, %v1171, 0
  %v1210 = vsel %vm179, %v1172, 0
  %v1213 = vsel %vm179, %v1173, 0
  %v1216 = vsel %vm179, %v1174, 0
  %v1219 = vsel %vm179, %v1175, 0
  %v1222 = vsel %vm179, %v1176, 0
  %v1225 = vsel %vm179, %v1177, 0
  %1227 = vmatprep.subr.mxu0 0.0
  %1228 = vmatpush1.msra.mxu0 %v1179
  %1229 = vmatprep.subr.mxu0 0.0
  %1230 = vmatpush1.msra.mxu0 %v1180
  %1231 = vmatprep.subr.mxu0 0.0
  %1232 = vmatpush1.msra.mxu0 %v1181
  %1233 = vmatprep.subr.mxu0 0.0
  %1234 = vmatpush1.msra.mxu0 %v1182
  %1235 = vmatprep.subr.mxu0 0.0
  %1236 = vmatpush1.msra.mxu0 0.0
  %1237 = vmatprep.subr.mxu0 0.0
  %1238 = vmatpush1.msra.mxu0 0.0
  %1239 = vmatprep.subr.mxu0 0.0
  %1240 = vmatpush1.msra.mxu0 0.0
  %1241 = vmatprep.subr.mxu0 0.0
  %1242 = vmatpush1.msra.mxu0 0.0
  %1243 = vmatprep.subr.mxu0 0.0
  %1244 = vmatpush1.msra.mxu0 0.0
  %1245 = vmatprep.subr.mxu0 0.0
  %1246 = vmatpush1.msra.mxu0 0.0
  %1247 = vmatprep.subr.mxu0 0.0
  %1248 = vmatpush1.msra.mxu0 0.0
  %1249 = vmatprep.subr.mxu0 0.0
  %1250 = vmatpush1.msra.mxu0 0.0
  %1251 = vmatprep.subr.mxu0 0.0
  %1252 = vmatpush1.msra.mxu0 0.0
  %1253 = vmatprep.subr.mxu0 0.0
  %1254 = vmatpush1.msra.mxu0 0.0
  %1255 = vmatprep.subr.mxu0 0.0
  %1256 = vmatpush1.msra.mxu0 0.0
  %1257 = vmatprep.subr.mxu0 0.0
  %1258 = vmatpush1.msra.mxu0 0.0
  %1259 = vmatprep.subr.mxu0 0.0
  %1260 = vmatpush1.msra.mxu0 0.0
  %1261 = vmatprep.subr.mxu0 0.0
  %1262 = vmatpush1.msra.mxu0 0.0
  %1263 = vmatprep.subr.mxu0 0.0
  %1264 = vmatpush1.msra.mxu0 0.0
  %1265 = vmatprep.subr.mxu0 0.0
  %1266 = vmatpush1.msra.mxu0 0.0
  %1267 = vmatprep.subr.mxu0 0.0
  %1268 = vmatpush1.msra.mxu0 0.0
  %1269 = vmatprep.subr.mxu0 0.0
  %1270 = vmatpush1.msra.mxu0 0.0
  %1271 = vmatprep.subr.mxu0 0.0
  %1272 = vmatpush1.msra.mxu0 0.0
  %1273 = vmatprep.subr.mxu0 0.0
  %1274 = vmatpush1.msra.mxu0 0.0
  %1275 = vmatprep.subr.mxu0 0.0
  %1276 = vmatpush1.msra.mxu0 0.0
  %1277 = vmatprep.subr.mxu0 0.0
  %1278 = vmatpush1.msra.mxu0 0.0
  %1279 = vmatprep.subr.mxu0 0.0
  %1280 = vmatpush1.msra.mxu0 0.0
  %1281 = vmatprep.subr.mxu0 0.0
  %1282 = vmatpush1.msra.mxu0 0.0
  %1283 = vmatprep.subr.mxu0 0.0
  %1284 = vmatpush1.msra.mxu0 0.0
  %1285 = vmatprep.subr.mxu0 0.0
  %1286 = vmatpush1.msra.mxu0 0.0
  %1287 = vmatprep.subr.mxu0 0.0
  %1288 = vmatpush1.msra.mxu0 0.0
  %1289 = vmatprep.subr.mxu0 0.0
  %1290 = vmatpush1.msra.mxu0 0.0
  %1291 = vmatprep.mubr.f32.mxu0 0.0
  %1292 = vmatmul.mubr.f32.gmra.mrb[0].mxu0 %v1189
  %v1293 = vpop.f32.mrb[0].mxu0
  %v1294 = vadd.f32 %v1187, %v1293
  %v1295 = vpop.f32.mrb[0].mxu0
  %1296 = vmatprep.mubr.f32.mxu0 0.0
  %1297 = vmatmul.mubr.f32.gmra.mrb[0].mxu0 %v1192
  %v1298 = vpop.f32.mrb[0].mxu0
  %v1299 = vadd.f32 %v1187, %v1298
  %v1300 = vpop.f32.mrb[0].mxu0
  %1301 = vmatprep.mubr.f32.mxu0 0.0
  %1302 = vmatmul.mubr.f32.gmra.mrb[0].mxu0 %v1195
  %v1303 = vpop.f32.mrb[0].mxu0
  %v1304 = vadd.f32 %v1187, %v1303
  %v1305 = vpop.f32.mrb[0].mxu0
  %1306 = vmatprep.mubr.f32.mxu0 0.0
  %1307 = vmatmul.mubr.f32.gmra.mrb[0].mxu0 %v1198
  %v1308 = vpop.f32.mrb[0].mxu0
  %v1309 = vadd.f32 %v1187, %v1308
  %v1310 = vpop.f32.mrb[0].mxu0
  %1311 = vmatprep.mubr.f32.mxu0 0.0
  %1312 = vmatmul.mubr.f32.gmra.mrb[0].mxu0 %v1201
  %v1313 = vpop.f32.mrb[0].mxu0
  %v1314 = vadd.f32 %v1187, %v1313
  %v1315 = vpop.f32.mrb[0].mxu0
  %1316 = vmatprep.mubr.f32.mxu0 0.0
  %1317 = vmatmul.mubr.f32.gmra.mrb[0].mxu0 %v1204
  %v1318 = vpop.f32.mrb[0].mxu0
  %v1319 = vadd.f32 %v1187, %v1318
  %v1320 = vpop.f32.mrb[0].mxu0
  %1321 = vmatprep.mubr.f32.mxu0 0.0
  %1322 = vmatmul.mubr.f32.gmra.mrb[0].mxu0 %v1207
  %v1323 = vpop.f32.mrb[0].mxu0
  %v1324 = vadd.f32 %v1187, %v1323
  %v1325 = vpop.f32.mrb[0].mxu0
  %1326 = vmatprep.mubr.f32.mxu0 0.0
  %1327 = vmatmul.mubr.f32.gmra.mrb[0].mxu0 %v1210
  %v1328 = vpop.f32.mrb[0].mxu0
  %v1329 = vadd.f32 %v1187, %v1328
  %v1330 = vpop.f32.mrb[0].mxu0
  %1331 = vmatprep.mubr.f32.mxu0 0.0
  %1332 = vmatmul.mubr.f32.gmra.mrb[0].mxu0 %v1213
  %v1333 = vpop.f32.mrb[0].mxu0
  %v1334 = vadd.f32 %v1187, %v1333
  %v1335 = vpop.f32.mrb[0].mxu0
  %1336 = vmatprep.mubr.f32.mxu0 0.0
  %1337 = vmatmul.mubr.f32.gmra.mrb[0].mxu0 %v1216
  %v1338 = vpop.f32.mrb[0].mxu0
  %v1339 = vadd.f32 %v1187, %v1338
  %v1340 = vpop.f32.mrb[0].mxu0
  %1341 = vmatprep.mubr.f32.mxu0 0.0
  %1342 = vmatmul.mubr.f32.gmra.mrb[0].mxu0 %v1219
  %v1343 = vpop.f32.mrb[0].mxu0
  %v1344 = vadd.f32 %v1187, %v1343
  %v1345 = vpop.f32.mrb[0].mxu0
  %1346 = vmatprep.mubr.f32.mxu0 0.0
  %1347 = vmatmul.mubr.f32.gmra.mrb[0].mxu0 %v1222
  %v1348 = vpop.f32.mrb[0].mxu0
  %v1349 = vadd.f32 %v1187, %v1348
  %v1350 = vpop.f32.mrb[0].mxu0
  %1351 = vmatprep.mubr.f32.mxu0 0.0
  %1352 = vmatmul.mubr.f32.gmra.mrb[0].mxu0 %v1225
  %v1353 = vpop.f32.mrb[0].mxu0
  %v1354 = vadd.f32 %v1187, %v1353
  %v1355 = vpop.f32.mrb[0].mxu0
  %1356 = vdwg.mxu0
  %v1357 = vld [vmem:[%s8 + $0xa] sm:$0x1]
  %v1358 = vmax.f32 %v1294, 0.0
  %v1359 = vmax.f32 %v1299, 0.0
  %v1360 = vmax.f32 %v1304, 0.0
  %v1361 = vmax.f32 %v1309, 0.0
  %v1362 = vmax.f32 %v1314, 0.0
  %v1363 = vmax.f32 %v1319, 0.0
  %v1364 = vmax.f32 %v1324, 0.0
  %v1365 = vmax.f32 %v1329, 0.0
  %v1366 = vmax.f32 %v1334, 0.0
  %v1367 = vmax.f32 %v1339, 0.0
  %v1368 = vmax.f32 %v1344, 0.0
  %v1369 = vmax.f32 %v1349, 0.0
  %v1370 = vmax.f32 %v1354, 0.0
  %v1371 = vmin.f32 %v1294, 0.0
  %v1372 = vmin.f32 %v1299, 0.0
  %v1373 = vmin.f32 %v1304, 0.0
  %v1374 = vmin.f32 %v1309, 0.0
  %v1375 = vmin.f32 %v1314, 0.0
  %v1376 = vmin.f32 %v1319, 0.0
  %v1377 = vmin.f32 %v1324, 0.0
  %v1378 = vmin.f32 %v1329, 0.0
  %v1379 = vmin.f32 %v1334, 0.0
  %v1380 = vmin.f32 %v1339, 0.0
  %v1381 = vmin.f32 %v1344, 0.0
  %v1382 = vmin.f32 %v1349, 0.0
  %v1383 = vmin.f32 %v1354, 0.0
  %v1384 = vlaneseq
  %v1385 = vshrl.u32 %v1384, 7
  %v1386 = vsub.s32 0, %v1385
  %v1387 = vrot.slane %v1357, %v1386
  %v1388 = vmul.f32 %v1387, %v1371
  %v1389 = vmul.f32 %v1387, %v1372
  %v1390 = vmul.f32 %v1387, %v1373
  %v1391 = vmul.f32 %v1387, %v1374
  %v1392 = vmul.f32 %v1387, %v1375
  %v1393 = vmul.f32 %v1387, %v1376
  %v1394 = vmul.f32 %v1387, %v1377
  %v1395 = vmul.f32 %v1387, %v1378
  %v1396 = vmul.f32 %v1387, %v1379
  %v1397 = vmul.f32 %v1387, %v1380
  %v1398 = vmul.f32 %v1387, %v1381
  %v1399 = vmul.f32 %v1387, %v1382
  %v1400 = vmul.f32 %v1387, %v1383
  %v1401 = vadd.f32 %v1358, %v1388
  %v1402 = vadd.f32 %v1359, %v1389
  %v1403 = vadd.f32 %v1360, %v1390
  %v1404 = vadd.f32 %v1361, %v1391
  %v1405 = vadd.f32 %v1362, %v1392
  %v1406 = vadd.f32 %v1363, %v1393
  %v1407 = vadd.f32 %v1364, %v1394
  %v1408 = vadd.f32 %v1365, %v1395
  %v1409 = vadd.f32 %v1366, %v1396
  %v1410 = vadd.f32 %v1367, %v1397
  %v1411 = vadd.f32 %v1368, %v1398
  %v1412 = vadd.f32 %v1369, %v1399
  %v1413 = vadd.f32 %v1370, %v1400
  %s1414 = scalar_lea.vmem %s6, 128
  %v1415 = vld [vmem:[%s1414] sm:$0xff]
  %v1416 = vld [vmem:[%s1414 + $0x8] sm:$0xff]
  %v1417 = vld [vmem:[%s1414 + $0x10] sm:$0xff]
  %v1418 = vld [vmem:[%s1414 + $0x18] sm:$0xff]
  %v1419 = vld [vmem:[%s8 + $0x9] sm:$0x1]
  %v1420 = vlaneseq
  %v1421 = vshrl.u32 %v1420, 7
  %v1422 = vsub.s32 0, %v1421
  %v1423 = vrot.slane %v1419, %v1422
  %v1425 = vsel %vm179, %v1401, 0
  %v1428 = vsel %vm179, %v1402, 0
  %v1431 = vsel %vm179, %v1403, 0
  %v1434 = vsel %vm179, %v1404, 0
  %v1437 = vsel %vm179, %v1405, 0
  %v1440 = vsel %vm179, %v1406, 0
  %v1443 = vsel %vm179, %v1407, 0
  %v1446 = vsel %vm179, %v1408, 0
  %v1449 = vsel %vm179, %v1409, 0
  %v1452 = vsel %vm179, %v1410, 0
  %v1455 = vsel %vm179, %v1411, 0
  %v1458 = vsel %vm179, %v1412, 0
  %v1461 = vsel %vm179, %v1413, 0
  %1463 = vmatprep.subr.mxu0 0.0
  %1464 = vmatpush1.msra.mxu0 %v1415
  %1465 = vmatprep.subr.mxu0 0.0
  %1466 = vmatpush1.msra.mxu0 %v1416
  %1467 = vmatprep.subr.mxu0 0.0
  %1468 = vmatpush1.msra.mxu0 %v1417
  %1469 = vmatprep.subr.mxu0 0.0
  %1470 = vmatpush1.msra.mxu0 %v1418
  %1471 = vmatprep.subr.mxu0 0.0
  %1472 = vmatpush1.msra.mxu0 0.0
  %1473 = vmatprep.subr.mxu0 0.0
  %1474 = vmatpush1.msra.mxu0 0.0
  %1475 = vmatprep.subr.mxu0 0.0
  %1476 = vmatpush1.msra.mxu0 0.0
  %1477 = vmatprep.subr.mxu0 0.0
  %1478 = vmatpush1.msra.mxu0 0.0
  %1479 = vmatprep.subr.mxu0 0.0
  %1480 = vmatpush1.msra.mxu0 0.0
  %1481 = vmatprep.subr.mxu0 0.0
  %1482 = vmatpush1.msra.mxu0 0.0
  %1483 = vmatprep.subr.mxu0 0.0
  %1484 = vmatpush1.msra.mxu0 0.0
  %1485 = vmatprep.subr.mxu0 0.0
  %1486 = vmatpush1.msra.mxu0 0.0
  %1487 = vmatprep.subr.mxu0 0.0
  %1488 = vmatpush1.msra.mxu0 0.0
  %1489 = vmatprep.subr.mxu0 0.0
  %1490 = vmatpush1.msra.mxu0 0.0
  %1491 = vmatprep.subr.mxu0 0.0
  %1492 = vmatpush1.msra.mxu0 0.0
  %1493 = vmatprep.subr.mxu0 0.0
  %1494 = vmatpush1.msra.mxu0 0.0
  %1495 = vmatprep.subr.mxu0 0.0
  %1496 = vmatpush1.msra.mxu0 0.0
  %1497 = vmatprep.subr.mxu0 0.0
  %1498 = vmatpush1.msra.mxu0 0.0
  %1499 = vmatprep.subr.mxu0 0.0
  %1500 = vmatpush1.msra.mxu0 0.0
  %1501 = vmatprep.subr.mxu0 0.0
  %1502 = vmatpush1.msra.mxu0 0.0
  %1503 = vmatprep.subr.mxu0 0.0
  %1504 = vmatpush1.msra.mxu0 0.0
  %1505 = vmatprep.subr.mxu0 0.0
  %1506 = vmatpush1.msra.mxu0 0.0
  %1507 = vmatprep.subr.mxu0 0.0
  %1508 = vmatpush1.msra.mxu0 0.0
  %1509 = vmatprep.subr.mxu0 0.0
  %1510 = vmatpush1.msra.mxu0 0.0
  %1511 = vmatprep.subr.mxu0 0.0
  %1512 = vmatpush1.msra.mxu0 0.0
  %1513 = vmatprep.subr.mxu0 0.0
  %1514 = vmatpush1.msra.mxu0 0.0
  %1515 = vmatprep.subr.mxu0 0.0
  %1516 = vmatpush1.msra.mxu0 0.0
  %1517 = vmatprep.subr.mxu0 0.0
  %1518 = vmatpush1.msra.mxu0 0.0
  %1519 = vmatprep.subr.mxu0 0.0
  %1520 = vmatpush1.msra.mxu0 0.0
  %1521 = vmatprep.subr.mxu0 0.0
  %1522 = vmatpush1.msra.mxu0 0.0
  %1523 = vmatprep.subr.mxu0 0.0
  %1524 = vmatpush1.msra.mxu0 0.0
  %1525 = vmatprep.subr.mxu0 0.0
  %1526 = vmatpush1.msra.mxu0 0.0
  %1527 = vmatprep.mubr.f32.mxu0 0.0
  %1528 = vmatmul.mubr.f32.gmra.mrb[0].mxu0 %v1425
  %v1529 = vpop.f32.mrb[0].mxu0
  %v1530 = vadd.f32 %v1423, %v1529
  %v1531 = vpop.f32.mrb[0].mxu0
  %1532 = vmatprep.mubr.f32.mxu0 0.0
  %1533 = vmatmul.mubr.f32.gmra.mrb[0].mxu0 %v1428
  %v1534 = vpop.f32.mrb[0].mxu0
  %v1535 = vadd.f32 %v1423, %v1534
  %v1536 = vpop.f32.mrb[0].mxu0
  %1537 = vmatprep.mubr.f32.mxu0 0.0
  %1538 = vmatmul.mubr.f32.gmra.mrb[0].mxu0 %v1431
  %v1539 = vpop.f32.mrb[0].mxu0
  %v1540 = vadd.f32 %v1423, %v1539
  %v1541 = vpop.f32.mrb[0].mxu0
  %1542 = vmatprep.mubr.f32.mxu0 0.0
  %1543 = vmatmul.mubr.f32.gmra.mrb[0].mxu0 %v1434
  %v1544 = vpop.f32.mrb[0].mxu0
  %v1545 = vadd.f32 %v1423, %v1544
  %v1546 = vpop.f32.mrb[0].mxu0
  %1547 = vmatprep.mubr.f32.mxu0 0.0
  %1548 = vmatmul.mubr.f32.gmra.mrb[0].mxu0 %v1437
  %v1549 = vpop.f32.mrb[0].mxu0
  %v1550 = vadd.f32 %v1423, %v1549
  %v1551 = vpop.f32.mrb[0].mxu0
  %1552 = vmatprep.mubr.f32.mxu0 0.0
  %1553 = vmatmul.mubr.f32.gmra.mrb[0].mxu0 %v1440
  %v1554 = vpop.f32.mrb[0].mxu0
  %v1555 = vadd.f32 %v1423, %v1554
  %v1556 = vpop.f32.mrb[0].mxu0
  %1557 = vmatprep.mubr.f32.mxu0 0.0
  %1558 = vmatmul.mubr.f32.gmra.mrb[0].mxu0 %v1443
  %v1559 = vpop.f32.mrb[0].mxu0
  %v1560 = vadd.f32 %v1423, %v1559
  %v1561 = vpop.f32.mrb[0].mxu0
  %1562 = vmatprep.mubr.f32.mxu0 0.0
  %1563 = vmatmul.mubr.f32.gmra.mrb[0].mxu0 %v1446
  %v1564 = vpop.f32.mrb[0].mxu0
  %v1565 = vadd.f32 %v1423, %v1564
  %v1566 = vpop.f32.mrb[0].mxu0
  %1567 = vmatprep.mubr.f32.mxu0 0.0
  %1568 = vmatmul.mubr.f32.gmra.mrb[0].mxu0 %v1449
  %v1569 = vpop.f32.mrb[0].mxu0
  %v1570 = vadd.f32 %v1423, %v1569
  %v1571 = vpop.f32.mrb[0].mxu0
  %1572 = vmatprep.mubr.f32.mxu0 0.0
  %1573 = vmatmul.mubr.f32.gmra.mrb[0].mxu0 %v1452
  %v1574 = vpop.f32.mrb[0].mxu0
  %v1575 = vadd.f32 %v1423, %v1574
  %v1576 = vpop.f32.mrb[0].mxu0
  %1577 = vmatprep.mubr.f32.mxu0 0.0
  %1578 = vmatmul.mubr.f32.gmra.mrb[0].mxu0 %v1455
  %v1579 = vpop.f32.mrb[0].mxu0
  %v1580 = vadd.f32 %v1423, %v1579
  %v1581 = vpop.f32.mrb[0].mxu0
  %1582 = vmatprep.mubr.f32.mxu0 0.0
  %1583 = vmatmul.mubr.f32.gmra.mrb[0].mxu0 %v1458
  %v1584 = vpop.f32.mrb[0].mxu0
  %v1585 = vadd.f32 %v1423, %v1584
  %v1586 = vpop.f32.mrb[0].mxu0
  %1587 = vmatprep.mubr.f32.mxu0 0.0
  %1588 = vmatmul.mubr.f32.gmra.mrb[0].mxu0 %v1461
  %v1589 = vpop.f32.mrb[0].mxu0
  %v1590 = vadd.f32 %v1423, %v1589
  %v1591 = vpop.f32.mrb[0].mxu0
  %1592 = vdwg.mxu0
  %v1593 = vld [vmem:[%s8 + $0xb] sm:$0x1]
  %v1594 = vmax.f32 %v1530, 0.0
  %v1595 = vmax.f32 %v1535, 0.0
  %v1596 = vmax.f32 %v1540, 0.0
  %v1597 = vmax.f32 %v1545, 0.0
  %v1598 = vmax.f32 %v1550, 0.0
  %v1599 = vmax.f32 %v1555, 0.0
  %v1600 = vmax.f32 %v1560, 0.0
  %v1601 = vmax.f32 %v1565, 0.0
  %v1602 = vmax.f32 %v1570, 0.0
  %v1603 = vmax.f32 %v1575, 0.0
  %v1604 = vmax.f32 %v1580, 0.0
  %v1605 = vmax.f32 %v1585, 0.0
  %v1606 = vmax.f32 %v1590, 0.0
  %v1607 = vmin.f32 %v1530, 0.0
  %v1608 = vmin.f32 %v1535, 0.0
  %v1609 = vmin.f32 %v1540, 0.0
  %v1610 = vmin.f32 %v1545, 0.0
  %v1611 = vmin.f32 %v1550, 0.0
  %v1612 = vmin.f32 %v1555, 0.0
  %v1613 = vmin.f32 %v1560, 0.0
  %v1614 = vmin.f32 %v1565, 0.0
  %v1615 = vmin.f32 %v1570, 0.0
  %v1616 = vmin.f32 %v1575, 0.0
  %v1617 = vmin.f32 %v1580, 0.0
  %v1618 = vmin.f32 %v1585, 0.0
  %v1619 = vmin.f32 %v1590, 0.0
  %v1620 = vlaneseq
  %v1621 = vshrl.u32 %v1620, 7
  %v1622 = vsub.s32 0, %v1621
  %v1623 = vrot.slane %v1593, %v1622
  %v1624 = vmul.f32 %v1623, %v1607
  %v1625 = vmul.f32 %v1623, %v1608
  %v1626 = vmul.f32 %v1623, %v1609
  %v1627 = vmul.f32 %v1623, %v1610
  %v1628 = vmul.f32 %v1623, %v1611
  %v1629 = vmul.f32 %v1623, %v1612
  %v1630 = vmul.f32 %v1623, %v1613
  %v1631 = vmul.f32 %v1623, %v1614
  %v1632 = vmul.f32 %v1623, %v1615
  %v1633 = vmul.f32 %v1623, %v1616
  %v1634 = vmul.f32 %v1623, %v1617
  %v1635 = vmul.f32 %v1623, %v1618
  %v1636 = vmul.f32 %v1623, %v1619
  %v1637 = vadd.f32 %v1594, %v1624
  %v1638 = vadd.f32 %v1595, %v1625
  %v1639 = vadd.f32 %v1596, %v1626
  %v1640 = vadd.f32 %v1597, %v1627
  %v1641 = vadd.f32 %v1598, %v1628
  %v1642 = vadd.f32 %v1599, %v1629
  %v1643 = vadd.f32 %v1600, %v1630
  %v1644 = vadd.f32 %v1601, %v1631
  %v1645 = vadd.f32 %v1602, %v1632
  %v1646 = vadd.f32 %v1603, %v1633
  %v1647 = vadd.f32 %v1604, %v1634
  %v1648 = vadd.f32 %v1605, %v1635
  %v1649 = vadd.f32 %v1606, %v1636
  %v1650 = vld [vmem:[%s7] sm:$0xff]
  %v1651 = vld [vmem:[%s7 + $0x8] sm:$0xff]
  %v1652 = vld [vmem:[%s7 + $0x10] sm:$0xff]
  %v1653 = vld [vmem:[%s7 + $0x18] sm:$0xff]
  %s1654 = sld [smem:[#allocation2]]
  %v1655 = vstv %s1654
  %v1657 = vsel %vm179, %v1637, 0
  %v1660 = vsel %vm179, %v1638, 0
  %v1663 = vsel %vm179, %v1639, 0
  %v1666 = vsel %vm179, %v1640, 0
  %v1669 = vsel %vm179, %v1641, 0
  %v1672 = vsel %vm179, %v1642, 0
  %v1675 = vsel %vm179, %v1643, 0
  %v1678 = vsel %vm179, %v1644, 0
  %v1681 = vsel %vm179, %v1645, 0
  %v1684 = vsel %vm179, %v1646, 0
  %v1687 = vsel %vm179, %v1647, 0
  %v1690 = vsel %vm179, %v1648, 0
  %v1693 = vsel %vm179, %v1649, 0
  %1695 = vmatprep.subr.mxu0 0.0
  %1696 = vmatpush1.msra.mxu0 %v1650
  %1697 = vmatprep.subr.mxu0 0.0
  %1698 = vmatpush1.msra.mxu0 %v1651
  %1699 = vmatprep.subr.mxu0 0.0
  %1700 = vmatpush1.msra.mxu0 %v1652
  %1701 = vmatprep.subr.mxu0 0.0
  %1702 = vmatpush1.msra.mxu0 %v1653
  %1703 = vmatprep.subr.mxu0 0.0
  %1704 = vmatpush1.msra.mxu0 0.0
  %1705 = vmatprep.subr.mxu0 0.0
  %1706 = vmatpush1.msra.mxu0 0.0
  %1707 = vmatprep.subr.mxu0 0.0
  %1708 = vmatpush1.msra.mxu0 0.0
  %1709 = vmatprep.subr.mxu0 0.0
  %1710 = vmatpush1.msra.mxu0 0.0
  %1711 = vmatprep.subr.mxu0 0.0
  %1712 = vmatpush1.msra.mxu0 0.0
  %1713 = vmatprep.subr.mxu0 0.0
  %1714 = vmatpush1.msra.mxu0 0.0
  %1715 = vmatprep.subr.mxu0 0.0
  %1716 = vmatpush1.msra.mxu0 0.0
  %1717 = vmatprep.subr.mxu0 0.0
  %1718 = vmatpush1.msra.mxu0 0.0
  %1719 = vmatprep.subr.mxu0 0.0
  %1720 = vmatpush1.msra.mxu0 0.0
  %1721 = vmatprep.subr.mxu0 0.0
  %1722 = vmatpush1.msra.mxu0 0.0
  %1723 = vmatprep.subr.mxu0 0.0
  %1724 = vmatpush1.msra.mxu0 0.0
  %1725 = vmatprep.subr.mxu0 0.0
  %1726 = vmatpush1.msra.mxu0 0.0
  %1727 = vmatprep.subr.mxu0 0.0
  %1728 = vmatpush1.msra.mxu0 0.0
  %1729 = vmatprep.subr.mxu0 0.0
  %1730 = vmatpush1.msra.mxu0 0.0
  %1731 = vmatprep.subr.mxu0 0.0
  %1732 = vmatpush1.msra.mxu0 0.0
  %1733 = vmatprep.subr.mxu0 0.0
  %1734 = vmatpush1.msra.mxu0 0.0
  %1735 = vmatprep.subr.mxu0 0.0
  %1736 = vmatpush1.msra.mxu0 0.0
  %1737 = vmatprep.subr.mxu0 0.0
  %1738 = vmatpush1.msra.mxu0 0.0
  %1739 = vmatprep.subr.mxu0 0.0
  %1740 = vmatpush1.msra.mxu0 0.0
  %1741 = vmatprep.subr.mxu0 0.0
  %1742 = vmatpush1.msra.mxu0 0.0
  %1743 = vmatprep.subr.mxu0 0.0
  %1744 = vmatpush1.msra.mxu0 0.0
  %1745 = vmatprep.subr.mxu0 0.0
  %1746 = vmatpush1.msra.mxu0 0.0
  %1747 = vmatprep.subr.mxu0 0.0
  %1748 = vmatpush1.msra.mxu0 0.0
  %1749 = vmatprep.subr.mxu0 0.0
  %1750 = vmatpush1.msra.mxu0 0.0
  %1751 = vmatprep.subr.mxu0 0.0
  %1752 = vmatpush1.msra.mxu0 0.0
  %1753 = vmatprep.subr.mxu0 0.0
  %1754 = vmatpush1.msra.mxu0 0.0
  %1755 = vmatprep.subr.mxu0 0.0
  %1756 = vmatpush1.msra.mxu0 0.0
  %1757 = vmatprep.subr.mxu0 0.0
  %1758 = vmatpush1.msra.mxu0 0.0
  %1759 = vmatprep.mubr.f32.mxu0 0.0
  %1760 = vmatmul.mubr.f32.gmra.mrb[0].mxu0 %v1657
  %v1761 = vpop.f32.mrb[0].mxu0
  %v1762 = vadd.f32 %v1655, %v1761
  %v1763 = vpop.f32.mrb[0].mxu0
  %1764 = vmatprep.mubr.f32.mxu0 0.0
  %1765 = vmatmul.mubr.f32.gmra.mrb[0].mxu0 %v1660
  %v1766 = vpop.f32.mrb[0].mxu0
  %v1767 = vadd.f32 %v1655, %v1766
  %v1768 = vpop.f32.mrb[0].mxu0
  %1769 = vmatprep.mubr.f32.mxu0 0.0
  %1770 = vmatmul.mubr.f32.gmra.mrb[0].mxu0 %v1663
  %v1771 = vpop.f32.mrb[0].mxu0
  %v1772 = vadd.f32 %v1655, %v1771
  %v1773 = vpop.f32.mrb[0].mxu0
  %1774 = vmatprep.mubr.f32.mxu0 0.0
  %1775 = vmatmul.mubr.f32.gmra.mrb[0].mxu0 %v1666
  %v1776 = vpop.f32.mrb[0].mxu0
  %v1777 = vadd.f32 %v1655, %v1776
  %v1778 = vpop.f32.mrb[0].mxu0
  %1779 = vmatprep.mubr.f32.mxu0 0.0
  %1780 = vmatmul.mubr.f32.gmra.mrb[0].mxu0 %v1669
  %v1781 = vpop.f32.mrb[0].mxu0
  %v1782 = vadd.f32 %v1655, %v1781
  %v1783 = vpop.f32.mrb[0].mxu0
  %1784 = vmatprep.mubr.f32.mxu0 0.0
  %1785 = vmatmul.mubr.f32.gmra.mrb[0].mxu0 %v1672
  %v1786 = vpop.f32.mrb[0].mxu0
  %v1787 = vadd.f32 %v1655, %v1786
  %v1788 = vpop.f32.mrb[0].mxu0
  %1789 = vmatprep.mubr.f32.mxu0 0.0
  %1790 = vmatmul.mubr.f32.gmra.mrb[0].mxu0 %v1675
  %v1791 = vpop.f32.mrb[0].mxu0
  %v1792 = vadd.f32 %v1655, %v1791
  %v1793 = vpop.f32.mrb[0].mxu0
  %1794 = vmatprep.mubr.f32.mxu0 0.0
  %1795 = vmatmul.mubr.f32.gmra.mrb[0].mxu0 %v1678
  %v1796 = vpop.f32.mrb[0].mxu0
  %v1797 = vadd.f32 %v1655, %v1796
  %v1798 = vpop.f32.mrb[0].mxu0
  %1799 = vmatprep.mubr.f32.mxu0 0.0
  %1800 = vmatmul.mubr.f32.gmra.mrb[0].mxu0 %v1681
  %v1801 = vpop.f32.mrb[0].mxu0
  %v1802 = vadd.f32 %v1655, %v1801
  %v1803 = vpop.f32.mrb[0].mxu0
  %1804 = vmatprep.mubr.f32.mxu0 0.0
  %1805 = vmatmul.mubr.f32.gmra.mrb[0].mxu0 %v1684
  %v1806 = vpop.f32.mrb[0].mxu0
  %v1807 = vadd.f32 %v1655, %v1806
  %v1808 = vpop.f32.mrb[0].mxu0
  %1809 = vmatprep.mubr.f32.mxu0 0.0
  %1810 = vmatmul.mubr.f32.gmra.mrb[0].mxu0 %v1687
  %v1811 = vpop.f32.mrb[0].mxu0
  %v1812 = vadd.f32 %v1655, %v1811
  %v1813 = vpop.f32.mrb[0].mxu0
  %1814 = vmatprep.mubr.f32.mxu0 0.0
  %1815 = vmatmul.mubr.f32.gmra.mrb[0].mxu0 %v1690
  %v1816 = vpop.f32.mrb[0].mxu0
  %v1817 = vadd.f32 %v1655, %v1816
  %v1818 = vpop.f32.mrb[0].mxu0
  %1819 = vmatprep.mubr.f32.mxu0 0.0
  %1820 = vmatmul.mubr.f32.gmra.mrb[0].mxu0 %v1693
  %v1821 = vpop.f32.mrb[0].mxu0
  %v1822 = vadd.f32 %v1655, %v1821
  %v1823 = vpop.f32.mrb[0].mxu0
  %1824 = vdwg.mxu0
  %vm1825 = vcmask 7168
  %1826 = vst.msk [vmem:[%s10] sm:$0xff] %vm1825, %v1762
  %1827 = vst.msk [vmem:[%s10 + $0x8] sm:$0xff] %vm1825, %v1767
  %1828 = vst.msk [vmem:[%s10 + $0x10] sm:$0xff] %vm1825, %v1772
  %1829 = vst.msk [vmem:[%s10 + $0x18] sm:$0xff] %vm1825, %v1777
  %1830 = vst.msk [vmem:[%s10 + $0x20] sm:$0xff] %vm1825, %v1782
  %1831 = vst.msk [vmem:[%s10 + $0x28] sm:$0xff] %vm1825, %v1787
  %1832 = vst.msk [vmem:[%s10 + $0x30] sm:$0xff] %vm1825, %v1792
  %1833 = vst.msk [vmem:[%s10 + $0x38] sm:$0xff] %vm1825, %v1797
  %1834 = vst.msk [vmem:[%s10 + $0x40] sm:$0xff] %vm1825, %v1802
  %1835 = vst.msk [vmem:[%s10 + $0x48] sm:$0xff] %vm1825, %v1807
  %1836 = vst.msk [vmem:[%s10 + $0x50] sm:$0xff] %vm1825, %v1812
  %1837 = vst.msk [vmem:[%s10 + $0x58] sm:$0xff] %vm1825, %v1817
  %vm1838 = vcmask 5120
  %1839 = vst.msk [vmem:[%s10 + $0x60] sm:$0x3f] %vm1838, %v1822
  // Predicated region
  $region42: #{tpu_custom_call.1} parent=0 // pred_check
    _
  $region43: #{tpu_custom_call.1} parent=0 // pred_check_branch
    %1841 = sbr.rel (0) target = $region45
  $region44: #{tpu_custom_call.1} parent=0 // pred_region
    _
  $region45: #{tpu_custom_call.1} parent=0 // pred_fallthru
    _
  // Predicated region
  $region46: #{tpu_custom_call.1} parent=0 // pred_check
    _
  $region47: #{tpu_custom_call.1} parent=0 // pred_check_branch
    %1843 = sbr.rel (0) target = $region49
  $region48: #{tpu_custom_call.1} parent=0 // pred_region
    _
  $region49: #{tpu_custom_call.1} parent=0 // pred_fallthru
    _

</llo_original>
